<compile_context>
chip_gen: v5e
topology: v5e:2x2
jax: 0.10.0
libtpu: 0.0.40
codegen_flags: <defaults>
</compile_context>

<pallas_src>
import functools

import jax
import jax.numpy as jnp
from jax.experimental import pallas as pl
from jax.experimental.pallas import tpu as pltpu


def _round_up(a, m):
    return (a + m - 1) // m * m


# ----------------------------- Pallas kernel ------------------------------ #
def lstm_fc_kernel(x_ref, w_ref, b_ref, o_ref, hseq_ref, *,
                   num_layers, hidden_size, seq_len, batch,
                   wih_off, wih_rows, whh_off, fc1_off, fc2_off, out_dim):
    """x_ref:    (T*B, D0_pad) f32  time-major input, lanes zero-padded
       w_ref:    (RW, PW)      bf16 packed weights (pre-transposed, tile-aligned rows)
       b_ref:    (L+2, PW)     f32  packed biases  (lane zero-padded)
       o_ref:    (B, out_dim)  f32
       hseq_ref: (T*B, H)      f32  VMEM scratch: previous layer's h_t sequence."""
    H, T, B = hidden_size, seq_len, batch
    PW = w_ref.shape[1]

    z1_acc = None
    for l in range(num_layers):
        last = (l == num_layers - 1)

        # ---- per-layer prologue (off the serial path) ----
        wih = w_ref[wih_off[l]:wih_off[l] + wih_rows[l], :]      # (D_pad, PW) bf16
        whh = w_ref[whh_off[l]:whh_off[l] + H, :]                # (H, PW)     bf16
        bias = b_ref[l:l + 1, :]                                 # (1, PW)     f32

        seq_bf = (x_ref[...] if l == 0 else hseq_ref[...]).astype(jnp.bfloat16)
        # ONE fused input projection over all timesteps and all 4 gates.
        xproj = jnp.dot(seq_bf, wih, preferred_element_type=jnp.float32) + bias  # (T*B, PW)

        h = jnp.zeros((B, H), jnp.float32)
        c = jnp.zeros((B, H), jnp.float32)
        if last:
            z1_acc = jnp.zeros((B, PW), jnp.float32)

        # ---- serial recurrence: ONE fused (B,H)@(H,4H) matmul per step ----
        for t in range(T):
            lo = t * B
            gates = xproj[lo:lo + B, :] + jnp.dot(
                h.astype(jnp.bfloat16), whh, preferred_element_type=jnp.float32)
            i_g = jax.nn.sigmoid(gates[:, 0 * H:1 * H])
            f_g = jax.nn.sigmoid(gates[:, 1 * H:2 * H])
            g_g = jnp.tanh(gates[:, 2 * H:3 * H])
            o_g = jax.nn.sigmoid(gates[:, 3 * H:4 * H])
            c = f_g * c + i_g * g_g
            h = o_g * jnp.tanh(c)
            if not last:
                hseq_ref[lo:lo + B, :] = h                # next layer's input sequence
            else:
                # fc1 term for this timestep, interleaved with the recurrence so it
                # hides under the next step's serial W_hh dependency (16-row-aligned).
                w1_t = w_ref[fc1_off + t * H:fc1_off + (t + 1) * H, :]   # (H, PW) bf16
                z1_acc = z1_acc + jnp.dot(jnp.tanh(h).astype(jnp.bfloat16), w1_t,
                                          preferred_element_type=jnp.float32)

    # ---- FC head epilogue ----
    b1 = b_ref[num_layers:num_layers + 1, :]                     # (1, PW) f32
    b2 = b_ref[num_layers + 1:num_layers + 2, :]                 # (1, PW) f32
    # Padded lanes of z1 become sigmoid(0)=0.5 but multiply zero rows of W2 -> exact.
    z1 = jax.nn.sigmoid(z1_acc + b1)                             # (B, PW)
    w2 = w_ref[fc2_off:fc2_off + PW, :]                          # (PW, PW) bf16
    z2 = jnp.dot(z1.astype(jnp.bfloat16), w2, preferred_element_type=jnp.float32) + b2
    o_ref[...] = z2[:, 0:out_dim].astype(o_ref.dtype)


# --------------------- one-time parameter packing prep --------------------- #
def pack_params(params, *, num_layers, hidden_size, seq_len, input_len, out_len, out_size):
    H = hidden_size
    G = 4 * H
    T = seq_len
    out_dim = out_len * out_size
    PW = _round_up(max(G, input_len, out_dim), 128)

    def pad2d(a, rows, cols):
        a = jnp.asarray(a, jnp.float32)
        return jnp.pad(a, ((0, rows - a.shape[0]), (0, cols - a.shape[1])))

    wrows, wih_off, wih_rows, whh_off = [], [], [], []
    r = 0
    for l in range(num_layers):
        p = params["lstm"][l]
        d_in = p["w_ih"].shape[1]
        d_pad = _round_up(d_in, 16)              # bf16 packed-sublane tile
        wih_off.append(r); wih_rows.append(d_pad)
        wrows.append(pad2d(p["w_ih"].T, d_pad, PW)); r += d_pad
        h_pad = _round_up(H, 16)
        whh_off.append(r)
        wrows.append(pad2d(p["w_hh"].T, h_pad, PW)); r += h_pad
    fc1_off = r
    wrows.append(pad2d(params["fc1_w"].T, T * H, PW)); r += T * H       # (T*H, input_len)
    fc2_off = r
    wrows.append(pad2d(params["fc2_w"].T, PW, PW)); r += PW             # (input_len, out_dim)
    wpack = jnp.concatenate(wrows, axis=0).astype(jnp.bfloat16)

    brows = []
    for l in range(num_layers):
        p = params["lstm"][l]
        brows.append(pad2d((p["b_ih"] + p["b_hh"]).reshape(1, G), 1, PW))
    brows.append(pad2d(params["fc1_b"].reshape(1, input_len), 1, PW))
    brows.append(pad2d(params["fc2_b"].reshape(1, out_dim), 1, PW))
    bpack = jnp.concatenate(brows, axis=0).astype(jnp.float32)

    meta = dict(wih_off=tuple(wih_off), wih_rows=tuple(wih_rows), whh_off=tuple(whh_off),
                fc1_off=int(fc1_off), fc2_off=int(fc2_off),
                d0_pad=int(wih_rows[0]), out_dim=int(out_dim))
    return wpack, bpack, meta


# ------------------------------ per-call wrapper --------------------------- #
def model_forward(x, wpack, bpack, meta, *, num_layers, hidden_size, out_len, out_size):
    B, T, D = x.shape
    H = hidden_size
    out_dim = meta["out_dim"]

    # Per-call prep: time-major flatten + lane pad to the packed W_ih row count.
    x2d = jnp.transpose(x, (1, 0, 2)).reshape(T * B, D).astype(jnp.float32)
    x2d = jnp.pad(x2d, ((0, 0), (0, meta["d0_pad"] - D)))

    kernel = functools.partial(
        lstm_fc_kernel,
        num_layers=num_layers, hidden_size=H, seq_len=T, batch=B,
        wih_off=meta["wih_off"], wih_rows=meta["wih_rows"], whh_off=meta["whh_off"],
        fc1_off=meta["fc1_off"], fc2_off=meta["fc2_off"], out_dim=out_dim,
    )
    out2d = pl.pallas_call(
        kernel,
        out_shape=jax.ShapeDtypeStruct((B, out_dim), jnp.float32),
        in_specs=[pl.BlockSpec(memory_space=pltpu.MemorySpace.VMEM)] * 3,
        out_specs=pl.BlockSpec(memory_space=pltpu.MemorySpace.VMEM),
        scratch_shapes=[pltpu.VMEM((T * B, H), jnp.float32)],
    )(x2d, wpack, bpack)
    # NOTE: when batch grows, add a grid over batch tiles with
    # dimension_semantics=("parallel",) so both v7x TensorCores are used.
    return out2d.reshape(B, out_len, out_size)


# ----------------------- pure-JAX reference (check) ------------------------ #
def reference_forward(x, params, *, num_layers, hidden_size, out_len, out_size):
    B, T, _ = x.shape
    H = hidden_size
    layer_in = x
    for l in range(num_layers):
        p = params["lstm"][l]
        h = jnp.zeros((B, H), jnp.float32)
        c = jnp.zeros((B, H), jnp.float32)
        outs = []
        for t in range(T):
            gates = (layer_in[:, t, :] @ p["w_ih"].T + h @ p["w_hh"].T
                     + p["b_ih"][0] + p["b_hh"][0])
            i_g = jax.nn.sigmoid(gates[:, 0:H])
            f_g = jax.nn.sigmoid(gates[:, H:2 * H])
            g_g = jnp.tanh(gates[:, 2 * H:3 * H])
            o_g = jax.nn.sigmoid(gates[:, 3 * H:4 * H])
            c = f_g * c + i_g * g_g
            h = o_g * jnp.tanh(c)
            outs.append(h)
        layer_in = jnp.stack(outs, axis=1)
    out = jnp.tanh(layer_in).reshape(B, -1)
    out = jax.nn.sigmoid(out @ params["fc1_w"].T + params["fc1_b"][0])
    out = out @ params["fc2_w"].T + params["fc2_b"][0]
    return out.reshape(B, out_len, out_size)


# --------------------------- param construction ---------------------------- #
def init_params(key, *, input_size, hidden_size, num_layers, input_len, out_len, out_size):
    params = {"lstm": []}
    k = 1.0 / jnp.sqrt(hidden_size)
    keys = jax.random.split(key, 4 * num_layers + 4)
    ki = 0
    for l in range(num_layers):
        d_in = input_size if l == 0 else hidden_size
        w_ih = jax.random.uniform(keys[ki], (4 * hidden_size, d_in), jnp.float32, -k, k); ki += 1
        w_hh = jax.random.uniform(keys[ki], (4 * hidden_size, hidden_size), jnp.float32, -k, k); ki += 1
        b_ih = jax.random.uniform(keys[ki], (1, 4 * hidden_size), jnp.float32, -k, k); ki += 1
        b_hh = jax.random.uniform(keys[ki], (1, 4 * hidden_size), jnp.float32, -k, k); ki += 1
        params["lstm"].append({"w_ih": w_ih, "w_hh": w_hh, "b_ih": b_ih, "b_hh": b_hh})

    fan1 = input_len * hidden_size
    k1 = 1.0 / jnp.sqrt(fan1)
    params["fc1_w"] = jax.random.uniform(keys[ki], (input_len, fan1), jnp.float32, -k1, k1); ki += 1
    params["fc1_b"] = jax.random.uniform(keys[ki], (1, input_len), jnp.float32, -k1, k1); ki += 1
    k2 = 1.0 / jnp.sqrt(input_len)
    params["fc2_w"] = jax.random.uniform(keys[ki], (out_len * out_size, input_len), jnp.float32, -k2, k2); ki += 1
    params["fc2_b"] = jax.random.uniform(keys[ki], (1, out_len * out_size), jnp.float32, -k2, k2); ki += 1
    return params


# --------------------------------- main ------------------------------------ #
if __name__ == "__main__":
    input_size, hidden_size, num_layers = 4, 32, 2
    input_len, out_len, out_size = 8, 3, 5   # input_len == sequence length T
    batch = 2

    key = jax.random.PRNGKey(0)
    kx, kp = jax.random.split(key)
    x = jax.random.normal(kx, (batch, input_len, input_size), jnp.float32)
    params = init_params(
        kp,
        input_size=input_size, hidden_size=hidden_size, num_layers=num_layers,
        input_len=input_len, out_len=out_len, out_size=out_size,
    )

    # one-time packing prep (hoisted out of the per-call path)
    wpack, bpack, meta = pack_params(
        params,
        num_layers=num_layers, hidden_size=hidden_size, seq_len=input_len,
        input_len=input_len, out_len=out_len, out_size=out_size,
    )

    out = model_forward(
        x, wpack, bpack, meta,
        num_layers=num_layers, hidden_size=hidden_size,
        out_len=out_len, out_size=out_size,
    )
    out = jax.block_until_ready(out)

    ref = reference_forward(
        x, params,
        num_layers=num_layers, hidden_size=hidden_size,
        out_len=out_len, out_size=out_size,
    )
    assert out.shape == (batch, out_len, out_size)
    max_diff = jnp.max(jnp.abs(out - ref))
    # tolerance loosened (vs pure-f32) because matmul operands run in bf16 on the MXU
    assert jnp.allclose(out, ref, atol=5e-2, rtol=5e-2), f"max abs diff {max_diff}"
    print("KERNEL_OK")
</pallas_src>

<mosaic_0001>
module attributes {stable_mosaic.version = 11 : i64} {
  func.func @lstm_fc_kernel(%arg0: memref<16x16xf32, #tpu.memory_space<vmem>>, %arg1: memref<496x128xbf16, #tpu.memory_space<vmem>>, %arg2: memref<4x128xf32, #tpu.memory_space<vmem>>, %arg3: memref<2x15xf32, #tpu.memory_space<vmem>>, %arg4: memref<16x32xf32, #tpu.memory_space<vmem>>) attributes {dimension_semantics = [], scalar_prefetch = 0 : i64, scratch_operands = 1 : i64, tpu.core_type = #tpu.core_type<tc>} {
    %c0 = arith.constant 0 : index
    %c0_0 = arith.constant 0 : index
    %0 = vector.load %arg1[%c0, %c0_0] : memref<496x128xbf16, #tpu.memory_space<vmem>>, vector<16x128xbf16>
    %c16 = arith.constant 16 : index
    %c0_1 = arith.constant 0 : index
    %1 = vector.load %arg1[%c16, %c0_1] : memref<496x128xbf16, #tpu.memory_space<vmem>>, vector<32x128xbf16>
    %c0_2 = arith.constant 0 : index
    %c0_3 = arith.constant 0 : index
    %2 = vector.load %arg2[%c0_2, %c0_3] : memref<4x128xf32, #tpu.memory_space<vmem>>, vector<1x128xf32>
    %c0_4 = arith.constant 0 : index
    %c0_5 = arith.constant 0 : index
    %3 = vector.load %arg0[%c0_4, %c0_5] : memref<16x16xf32, #tpu.memory_space<vmem>>, vector<16x16xf32>
    %4 = arith.truncf %3 : vector<16x16xf32> to vector<16x16xbf16>
    %cst = arith.constant dense<0.000000e+00> : vector<16x128xf32>
    %5 = tpu.matmul %4, %0, %cst {dimension_numbers = #tpu.dot_dimension_numbers<[1], [0], [0], [1], [0, 0, 1, 1], [], []>} : vector<16x16xbf16>, vector<16x128xbf16>, vector<16x128xf32> -> vector<16x128xf32>
    %6 = vector.broadcast %2 : vector<1x128xf32> to vector<16x128xf32>
    %7 = arith.addf %5, %6 : vector<16x128xf32>
    %cst_6 = arith.constant 0.000000e+00 : f32
    %8 = vector.broadcast %cst_6 : f32 to vector<2x32xf32>
    %cst_7 = arith.constant 0.000000e+00 : f32
    %9 = vector.broadcast %cst_7 : f32 to vector<2x32xf32>
    %10 = vector.extract_strided_slice %7 {offsets = [0, 0], sizes = [2, 128], strides = [1, 1]} : vector<16x128xf32> to vector<2x128xf32>
    %11 = arith.truncf %8 : vector<2x32xf32> to vector<2x32xbf16>
    %cst_8 = arith.constant dense<0.000000e+00> : vector<2x128xf32>
    %12 = tpu.matmul %11, %1, %cst_8 {dimension_numbers = #tpu.dot_dimension_numbers<[1], [0], [0], [1], [0, 0, 1, 1], [], []>} : vector<2x32xbf16>, vector<32x128xbf16>, vector<2x128xf32> -> vector<2x128xf32>
    %13 = arith.addf %10, %12 : vector<2x128xf32>
    %14 = vector.extract_strided_slice %13 {offsets = [0, 0], sizes = [2, 32], strides = [1, 1]} : vector<2x128xf32> to vector<2x32xf32>
    %15 = arith.negf %14 : vector<2x32xf32>
    %16 = math.exp %15 : vector<2x32xf32>
    %cst_9 = arith.constant 1.000000e+00 : f32
    %17 = vector.broadcast %cst_9 : f32 to vector<2x32xf32>
    %18 = arith.addf %17, %16 : vector<2x32xf32>
    %19 = arith.divf %17, %18 : vector<2x32xf32>
    %20 = vector.extract_strided_slice %13 {offsets = [0, 32], sizes = [2, 32], strides = [1, 1]} : vector<2x128xf32> to vector<2x32xf32>
    %21 = arith.negf %20 : vector<2x32xf32>
    %22 = math.exp %21 : vector<2x32xf32>
    %cst_10 = arith.constant 1.000000e+00 : f32
    %23 = vector.broadcast %cst_10 : f32 to vector<2x32xf32>
    %24 = arith.addf %23, %22 : vector<2x32xf32>
    %25 = arith.divf %23, %24 : vector<2x32xf32>
    %26 = vector.extract_strided_slice %13 {offsets = [0, 64], sizes = [2, 32], strides = [1, 1]} : vector<2x128xf32> to vector<2x32xf32>
    %27 = math.tanh %26 : vector<2x32xf32>
    %28 = vector.extract_strided_slice %13 {offsets = [0, 96], sizes = [2, 32], strides = [1, 1]} : vector<2x128xf32> to vector<2x32xf32>
    %29 = arith.negf %28 : vector<2x32xf32>
    %30 = math.exp %29 : vector<2x32xf32>
    %cst_11 = arith.constant 1.000000e+00 : f32
    %31 = vector.broadcast %cst_11 : f32 to vector<2x32xf32>
    %32 = arith.addf %31, %30 : vector<2x32xf32>
    %33 = arith.divf %31, %32 : vector<2x32xf32>
    %34 = arith.mulf %25, %9 : vector<2x32xf32>
    %35 = arith.mulf %19, %27 : vector<2x32xf32>
    %36 = arith.addf %34, %35 : vector<2x32xf32>
    %37 = math.tanh %36 : vector<2x32xf32>
    %38 = arith.mulf %33, %37 : vector<2x32xf32>
    %c0_12 = arith.constant 0 : index
    %c0_13 = arith.constant 0 : index
    %39 = vector.load %arg4[%c0_12, %c0_13] : memref<16x32xf32, #tpu.memory_space<vmem>>, vector<2x32xf32>
    tpu.vector_store %arg4[%c0_12, %c0_13], %38 {strides = array<i32>} : memref<16x32xf32, #tpu.memory_space<vmem>>, vector<2x32xf32>,
    %40 = vector.extract_strided_slice %7 {offsets = [2, 0], sizes = [2, 128], strides = [1, 1]} : vector<16x128xf32> to vector<2x128xf32>
    %41 = arith.truncf %38 : vector<2x32xf32> to vector<2x32xbf16>
    %cst_14 = arith.constant dense<0.000000e+00> : vector<2x128xf32>
    %42 = tpu.matmul %41, %1, %cst_14 {dimension_numbers = #tpu.dot_dimension_numbers<[1], [0], [0], [1], [0, 0, 1, 1], [], []>} : vector<2x32xbf16>, vector<32x128xbf16>, vector<2x128xf32> -> vector<2x128xf32>
    %43 = arith.addf %40, %42 : vector<2x128xf32>
    %44 = vector.extract_strided_slice %43 {offsets = [0, 0], sizes = [2, 32], strides = [1, 1]} : vector<2x128xf32> to vector<2x32xf32>
    %45 = arith.negf %44 : vector<2x32xf32>
    %46 = math.exp %45 : vector<2x32xf32>
    %cst_15 = arith.constant 1.000000e+00 : f32
    %47 = vector.broadcast %cst_15 : f32 to vector<2x32xf32>
    %48 = arith.addf %47, %46 : vector<2x32xf32>
    %49 = arith.divf %47, %48 : vector<2x32xf32>
    %50 = vector.extract_strided_slice %43 {offsets = [0, 32], sizes = [2, 32], strides = [1, 1]} : vector<2x128xf32> to vector<2x32xf32>
    %51 = arith.negf %50 : vector<2x32xf32>
    %52 = math.exp %51 : vector<2x32xf32>
    %cst_16 = arith.constant 1.000000e+00 : f32
    %53 = vector.broadcast %cst_16 : f32 to vector<2x32xf32>
    %54 = arith.addf %53, %52 : vector<2x32xf32>
    %55 = arith.divf %53, %54 : vector<2x32xf32>
    %56 = vector.extract_strided_slice %43 {offsets = [0, 64], sizes = [2, 32], strides = [1, 1]} : vector<2x128xf32> to vector<2x32xf32>
    %57 = math.tanh %56 : vector<2x32xf32>
    %58 = vector.extract_strided_slice %43 {offsets = [0, 96], sizes = [2, 32], strides = [1, 1]} : vector<2x128xf32> to vector<2x32xf32>
    %59 = arith.negf %58 : vector<2x32xf32>
    %60 = math.exp %59 : vector<2x32xf32>
    %cst_17 = arith.constant 1.000000e+00 : f32
    %61 = vector.broadcast %cst_17 : f32 to vector<2x32xf32>
    %62 = arith.addf %61, %60 : vector<2x32xf32>
    %63 = arith.divf %61, %62 : vector<2x32xf32>
    %64 = arith.mulf %55, %36 : vector<2x32xf32>
    %65 = arith.mulf %49, %57 : vector<2x32xf32>
    %66 = arith.addf %64, %65 : vector<2x32xf32>
    %67 = math.tanh %66 : vector<2x32xf32>
    %68 = arith.mulf %63, %67 : vector<2x32xf32>
    %c2 = arith.constant 2 : index
    %c0_18 = arith.constant 0 : index
    %69 = vector.load %arg4[%c2, %c0_18] : memref<16x32xf32, #tpu.memory_space<vmem>>, vector<2x32xf32>
    tpu.vector_store %arg4[%c2, %c0_18], %68 {strides = array<i32>} : memref<16x32xf32, #tpu.memory_space<vmem>>, vector<2x32xf32>,
    %70 = vector.extract_strided_slice %7 {offsets = [4, 0], sizes = [2, 128], strides = [1, 1]} : vector<16x128xf32> to vector<2x128xf32>
    %71 = arith.truncf %68 : vector<2x32xf32> to vector<2x32xbf16>
    %cst_19 = arith.constant dense<0.000000e+00> : vector<2x128xf32>
    %72 = tpu.matmul %71, %1, %cst_19 {dimension_numbers = #tpu.dot_dimension_numbers<[1], [0], [0], [1], [0, 0, 1, 1], [], []>} : vector<2x32xbf16>, vector<32x128xbf16>, vector<2x128xf32> -> vector<2x128xf32>
    %73 = arith.addf %70, %72 : vector<2x128xf32>
    %74 = vector.extract_strided_slice %73 {offsets = [0, 0], sizes = [2, 32], strides = [1, 1]} : vector<2x128xf32> to vector<2x32xf32>
    %75 = arith.negf %74 : vector<2x32xf32>
    %76 = math.exp %75 : vector<2x32xf32>
    %cst_20 = arith.constant 1.000000e+00 : f32
    %77 = vector.broadcast %cst_20 : f32 to vector<2x32xf32>
    %78 = arith.addf %77, %76 : vector<2x32xf32>
    %79 = arith.divf %77, %78 : vector<2x32xf32>
    %80 = vector.extract_strided_slice %73 {offsets = [0, 32], sizes = [2, 32], strides = [1, 1]} : vector<2x128xf32> to vector<2x32xf32>
    %81 = arith.negf %80 : vector<2x32xf32>
    %82 = math.exp %81 : vector<2x32xf32>
    %cst_21 = arith.constant 1.000000e+00 : f32
    %83 = vector.broadcast %cst_21 : f32 to vector<2x32xf32>
    %84 = arith.addf %83, %82 : vector<2x32xf32>
    %85 = arith.divf %83, %84 : vector<2x32xf32>
    %86 = vector.extract_strided_slice %73 {offsets = [0, 64], sizes = [2, 32], strides = [1, 1]} : vector<2x128xf32> to vector<2x32xf32>
    %87 = math.tanh %86 : vector<2x32xf32>
    %88 = vector.extract_strided_slice %73 {offsets = [0, 96], sizes = [2, 32], strides = [1, 1]} : vector<2x128xf32> to vector<2x32xf32>
    %89 = arith.negf %88 : vector<2x32xf32>
    %90 = math.exp %89 : vector<2x32xf32>
    %cst_22 = arith.constant 1.000000e+00 : f32
    %91 = vector.broadcast %cst_22 : f32 to vector<2x32xf32>
    %92 = arith.addf %91, %90 : vector<2x32xf32>
    %93 = arith.divf %91, %92 : vector<2x32xf32>
    %94 = arith.mulf %85, %66 : vector<2x32xf32>
    %95 = arith.mulf %79, %87 : vector<2x32xf32>
    %96 = arith.addf %94, %95 : vector<2x32xf32>
    %97 = math.tanh %96 : vector<2x32xf32>
    %98 = arith.mulf %93, %97 : vector<2x32xf32>
    %c4 = arith.constant 4 : index
    %c0_23 = arith.constant 0 : index
    %99 = vector.load %arg4[%c4, %c0_23] : memref<16x32xf32, #tpu.memory_space<vmem>>, vector<2x32xf32>
    tpu.vector_store %arg4[%c4, %c0_23], %98 {strides = array<i32>} : memref<16x32xf32, #tpu.memory_space<vmem>>, vector<2x32xf32>,
    %100 = vector.extract_strided_slice %7 {offsets = [6, 0], sizes = [2, 128], strides = [1, 1]} : vector<16x128xf32> to vector<2x128xf32>
    %101 = arith.truncf %98 : vector<2x32xf32> to vector<2x32xbf16>
    %cst_24 = arith.constant dense<0.000000e+00> : vector<2x128xf32>
    %102 = tpu.matmul %101, %1, %cst_24 {dimension_numbers = #tpu.dot_dimension_numbers<[1], [0], [0], [1], [0, 0, 1, 1], [], []>} : vector<2x32xbf16>, vector<32x128xbf16>, vector<2x128xf32> -> vector<2x128xf32>
    %103 = arith.addf %100, %102 : vector<2x128xf32>
    %104 = vector.extract_strided_slice %103 {offsets = [0, 0], sizes = [2, 32], strides = [1, 1]} : vector<2x128xf32> to vector<2x32xf32>
    %105 = arith.negf %104 : vector<2x32xf32>
    %106 = math.exp %105 : vector<2x32xf32>
    %cst_25 = arith.constant 1.000000e+00 : f32
    %107 = vector.broadcast %cst_25 : f32 to vector<2x32xf32>
    %108 = arith.addf %107, %106 : vector<2x32xf32>
    %109 = arith.divf %107, %108 : vector<2x32xf32>
    %110 = vector.extract_strided_slice %103 {offsets = [0, 32], sizes = [2, 32], strides = [1, 1]} : vector<2x128xf32> to vector<2x32xf32>
    %111 = arith.negf %110 : vector<2x32xf32>
    %112 = math.exp %111 : vector<2x32xf32>
    %cst_26 = arith.constant 1.000000e+00 : f32
    %113 = vector.broadcast %cst_26 : f32 to vector<2x32xf32>
    %114 = arith.addf %113, %112 : vector<2x32xf32>
    %115 = arith.divf %113, %114 : vector<2x32xf32>
    %116 = vector.extract_strided_slice %103 {offsets = [0, 64], sizes = [2, 32], strides = [1, 1]} : vector<2x128xf32> to vector<2x32xf32>
    %117 = math.tanh %116 : vector<2x32xf32>
    %118 = vector.extract_strided_slice %103 {offsets = [0, 96], sizes = [2, 32], strides = [1, 1]} : vector<2x128xf32> to vector<2x32xf32>
    %119 = arith.negf %118 : vector<2x32xf32>
    %120 = math.exp %119 : vector<2x32xf32>
    %cst_27 = arith.constant 1.000000e+00 : f32
    %121 = vector.broadcast %cst_27 : f32 to vector<2x32xf32>
    %122 = arith.addf %121, %120 : vector<2x32xf32>
    %123 = arith.divf %121, %122 : vector<2x32xf32>
    %124 = arith.mulf %115, %96 : vector<2x32xf32>
    %125 = arith.mulf %109, %117 : vector<2x32xf32>
    %126 = arith.addf %124, %125 : vector<2x32xf32>
    %127 = math.tanh %126 : vector<2x32xf32>
    %128 = arith.mulf %123, %127 : vector<2x32xf32>
    %c6 = arith.constant 6 : index
    %c0_28 = arith.constant 0 : index
    %129 = vector.load %arg4[%c6, %c0_28] : memref<16x32xf32, #tpu.memory_space<vmem>>, vector<2x32xf32>
    tpu.vector_store %arg4[%c6, %c0_28], %128 {strides = array<i32>} : memref<16x32xf32, #tpu.memory_space<vmem>>, vector<2x32xf32>,
    %130 = vector.extract_strided_slice %7 {offsets = [8, 0], sizes = [2, 128], strides = [1, 1]} : vector<16x128xf32> to vector<2x128xf32>
    %131 = arith.truncf %128 : vector<2x32xf32> to vector<2x32xbf16>
    %cst_29 = arith.constant dense<0.000000e+00> : vector<2x128xf32>
    %132 = tpu.matmul %131, %1, %cst_29 {dimension_numbers = #tpu.dot_dimension_numbers<[1], [0], [0], [1], [0, 0, 1, 1], [], []>} : vector<2x32xbf16>, vector<32x128xbf16>, vector<2x128xf32> -> vector<2x128xf32>
    %133 = arith.addf %130, %132 : vector<2x128xf32>
    %134 = vector.extract_strided_slice %133 {offsets = [0, 0], sizes = [2, 32], strides = [1, 1]} : vector<2x128xf32> to vector<2x32xf32>
    %135 = arith.negf %134 : vector<2x32xf32>
    %136 = math.exp %135 : vector<2x32xf32>
    %cst_30 = arith.constant 1.000000e+00 : f32
    %137 = vector.broadcast %cst_30 : f32 to vector<2x32xf32>
    %138 = arith.addf %137, %136 : vector<2x32xf32>
    %139 = arith.divf %137, %138 : vector<2x32xf32>
    %140 = vector.extract_strided_slice %133 {offsets = [0, 32], sizes = [2, 32], strides = [1, 1]} : vector<2x128xf32> to vector<2x32xf32>
    %141 = arith.negf %140 : vector<2x32xf32>
    %142 = math.exp %141 : vector<2x32xf32>
    %cst_31 = arith.constant 1.000000e+00 : f32
    %143 = vector.broadcast %cst_31 : f32 to vector<2x32xf32>
    %144 = arith.addf %143, %142 : vector<2x32xf32>
    %145 = arith.divf %143, %144 : vector<2x32xf32>
    %146 = vector.extract_strided_slice %133 {offsets = [0, 64], sizes = [2, 32], strides = [1, 1]} : vector<2x128xf32> to vector<2x32xf32>
    %147 = math.tanh %146 : vector<2x32xf32>
    %148 = vector.extract_strided_slice %133 {offsets = [0, 96], sizes = [2, 32], strides = [1, 1]} : vector<2x128xf32> to vector<2x32xf32>
    %149 = arith.negf %148 : vector<2x32xf32>
    %150 = math.exp %149 : vector<2x32xf32>
    %cst_32 = arith.constant 1.000000e+00 : f32
    %151 = vector.broadcast %cst_32 : f32 to vector<2x32xf32>
    %152 = arith.addf %151, %150 : vector<2x32xf32>
    %153 = arith.divf %151, %152 : vector<2x32xf32>
    %154 = arith.mulf %145, %126 : vector<2x32xf32>
    %155 = arith.mulf %139, %147 : vector<2x32xf32>
    %156 = arith.addf %154, %155 : vector<2x32xf32>
    %157 = math.tanh %156 : vector<2x32xf32>
    %158 = arith.mulf %153, %157 : vector<2x32xf32>
    %c8 = arith.constant 8 : index
    %c0_33 = arith.constant 0 : index
    %159 = vector.load %arg4[%c8, %c0_33] : memref<16x32xf32, #tpu.memory_space<vmem>>, vector<2x32xf32>
    tpu.vector_store %arg4[%c8, %c0_33], %158 {strides = array<i32>} : memref<16x32xf32, #tpu.memory_space<vmem>>, vector<2x32xf32>,
    %160 = vector.extract_strided_slice %7 {offsets = [10, 0], sizes = [2, 128], strides = [1, 1]} : vector<16x128xf32> to vector<2x128xf32>
    %161 = arith.truncf %158 : vector<2x32xf32> to vector<2x32xbf16>
    %cst_34 = arith.constant dense<0.000000e+00> : vector<2x128xf32>
    %162 = tpu.matmul %161, %1, %cst_34 {dimension_numbers = #tpu.dot_dimension_numbers<[1], [0], [0], [1], [0, 0, 1, 1], [], []>} : vector<2x32xbf16>, vector<32x128xbf16>, vector<2x128xf32> -> vector<2x128xf32>
    %163 = arith.addf %160, %162 : vector<2x128xf32>
    %164 = vector.extract_strided_slice %163 {offsets = [0, 0], sizes = [2, 32], strides = [1, 1]} : vector<2x128xf32> to vector<2x32xf32>
    %165 = arith.negf %164 : vector<2x32xf32>
    %166 = math.exp %165 : vector<2x32xf32>
    %cst_35 = arith.constant 1.000000e+00 : f32
    %167 = vector.broadcast %cst_35 : f32 to vector<2x32xf32>
    %168 = arith.addf %167, %166 : vector<2x32xf32>
    %169 = arith.divf %167, %168 : vector<2x32xf32>
    %170 = vector.extract_strided_slice %163 {offsets = [0, 32], sizes = [2, 32], strides = [1, 1]} : vector<2x128xf32> to vector<2x32xf32>
    %171 = arith.negf %170 : vector<2x32xf32>
    %172 = math.exp %171 : vector<2x32xf32>
    %cst_36 = arith.constant 1.000000e+00 : f32
    %173 = vector.broadcast %cst_36 : f32 to vector<2x32xf32>
    %174 = arith.addf %173, %172 : vector<2x32xf32>
    %175 = arith.divf %173, %174 : vector<2x32xf32>
    %176 = vector.extract_strided_slice %163 {offsets = [0, 64], sizes = [2, 32], strides = [1, 1]} : vector<2x128xf32> to vector<2x32xf32>
    %177 = math.tanh %176 : vector<2x32xf32>
    %178 = vector.extract_strided_slice %163 {offsets = [0, 96], sizes = [2, 32], strides = [1, 1]} : vector<2x128xf32> to vector<2x32xf32>
    %179 = arith.negf %178 : vector<2x32xf32>
    %180 = math.exp %179 : vector<2x32xf32>
    %cst_37 = arith.constant 1.000000e+00 : f32
    %181 = vector.broadcast %cst_37 : f32 to vector<2x32xf32>
    %182 = arith.addf %181, %180 : vector<2x32xf32>
    %183 = arith.divf %181, %182 : vector<2x32xf32>
    %184 = arith.mulf %175, %156 : vector<2x32xf32>
    %185 = arith.mulf %169, %177 : vector<2x32xf32>
    %186 = arith.addf %184, %185 : vector<2x32xf32>
    %187 = math.tanh %186 : vector<2x32xf32>
    %188 = arith.mulf %183, %187 : vector<2x32xf32>
    %c10 = arith.constant 10 : index
    %c0_38 = arith.constant 0 : index
    %189 = vector.load %arg4[%c10, %c0_38] : memref<16x32xf32, #tpu.memory_space<vmem>>, vector<2x32xf32>
    tpu.vector_store %arg4[%c10, %c0_38], %188 {strides = array<i32>} : memref<16x32xf32, #tpu.memory_space<vmem>>, vector<2x32xf32>,
    %190 = vector.extract_strided_slice %7 {offsets = [12, 0], sizes = [2, 128], strides = [1, 1]} : vector<16x128xf32> to vector<2x128xf32>
    %191 = arith.truncf %188 : vector<2x32xf32> to vector<2x32xbf16>
    %cst_39 = arith.constant dense<0.000000e+00> : vector<2x128xf32>
    %192 = tpu.matmul %191, %1, %cst_39 {dimension_numbers = #tpu.dot_dimension_numbers<[1], [0], [0], [1], [0, 0, 1, 1], [], []>} : vector<2x32xbf16>, vector<32x128xbf16>, vector<2x128xf32> -> vector<2x128xf32>
    %193 = arith.addf %190, %192 : vector<2x128xf32>
    %194 = vector.extract_strided_slice %193 {offsets = [0, 0], sizes = [2, 32], strides = [1, 1]} : vector<2x128xf32> to vector<2x32xf32>
    %195 = arith.negf %194 : vector<2x32xf32>
    %196 = math.exp %195 : vector<2x32xf32>
    %cst_40 = arith.constant 1.000000e+00 : f32
    %197 = vector.broadcast %cst_40 : f32 to vector<2x32xf32>
    %198 = arith.addf %197, %196 : vector<2x32xf32>
    %199 = arith.divf %197, %198 : vector<2x32xf32>
    %200 = vector.extract_strided_slice %193 {offsets = [0, 32], sizes = [2, 32], strides = [1, 1]} : vector<2x128xf32> to vector<2x32xf32>
    %201 = arith.negf %200 : vector<2x32xf32>
    %202 = math.exp %201 : vector<2x32xf32>
    %cst_41 = arith.constant 1.000000e+00 : f32
    %203 = vector.broadcast %cst_41 : f32 to vector<2x32xf32>
    %204 = arith.addf %203, %202 : vector<2x32xf32>
    %205 = arith.divf %203, %204 : vector<2x32xf32>
    %206 = vector.extract_strided_slice %193 {offsets = [0, 64], sizes = [2, 32], strides = [1, 1]} : vector<2x128xf32> to vector<2x32xf32>
    %207 = math.tanh %206 : vector<2x32xf32>
    %208 = vector.extract_strided_slice %193 {offsets = [0, 96], sizes = [2, 32], strides = [1, 1]} : vector<2x128xf32> to vector<2x32xf32>
    %209 = arith.negf %208 : vector<2x32xf32>
    %210 = math.exp %209 : vector<2x32xf32>
    %cst_42 = arith.constant 1.000000e+00 : f32
    %211 = vector.broadcast %cst_42 : f32 to vector<2x32xf32>
    %212 = arith.addf %211, %210 : vector<2x32xf32>
    %213 = arith.divf %211, %212 : vector<2x32xf32>
    %214 = arith.mulf %205, %186 : vector<2x32xf32>
    %215 = arith.mulf %199, %207 : vector<2x32xf32>
    %216 = arith.addf %214, %215 : vector<2x32xf32>
    %217 = math.tanh %216 : vector<2x32xf32>
    %218 = arith.mulf %213, %217 : vector<2x32xf32>
    %c12 = arith.constant 12 : index
    %c0_43 = arith.constant 0 : index
    %219 = vector.load %arg4[%c12, %c0_43] : memref<16x32xf32, #tpu.memory_space<vmem>>, vector<2x32xf32>
    tpu.vector_store %arg4[%c12, %c0_43], %218 {strides = array<i32>} : memref<16x32xf32, #tpu.memory_space<vmem>>, vector<2x32xf32>,
    %220 = vector.extract_strided_slice %7 {offsets = [14, 0], sizes = [2, 128], strides = [1, 1]} : vector<16x128xf32> to vector<2x128xf32>
    %221 = arith.truncf %218 : vector<2x32xf32> to vector<2x32xbf16>
    %cst_44 = arith.constant dense<0.000000e+00> : vector<2x128xf32>
    %222 = tpu.matmul %221, %1, %cst_44 {dimension_numbers = #tpu.dot_dimension_numbers<[1], [0], [0], [1], [0, 0, 1, 1], [], []>} : vector<2x32xbf16>, vector<32x128xbf16>, vector<2x128xf32> -> vector<2x128xf32>
    %223 = arith.addf %220, %222 : vector<2x128xf32>
    %224 = vector.extract_strided_slice %223 {offsets = [0, 0], sizes = [2, 32], strides = [1, 1]} : vector<2x128xf32> to vector<2x32xf32>
    %225 = arith.negf %224 : vector<2x32xf32>
    %226 = math.exp %225 : vector<2x32xf32>
    %cst_45 = arith.constant 1.000000e+00 : f32
    %227 = vector.broadcast %cst_45 : f32 to vector<2x32xf32>
    %228 = arith.addf %227, %226 : vector<2x32xf32>
    %229 = arith.divf %227, %228 : vector<2x32xf32>
    %230 = vector.extract_strided_slice %223 {offsets = [0, 32], sizes = [2, 32], strides = [1, 1]} : vector<2x128xf32> to vector<2x32xf32>
    %231 = arith.negf %230 : vector<2x32xf32>
    %232 = math.exp %231 : vector<2x32xf32>
    %cst_46 = arith.constant 1.000000e+00 : f32
    %233 = vector.broadcast %cst_46 : f32 to vector<2x32xf32>
    %234 = arith.addf %233, %232 : vector<2x32xf32>
    %235 = arith.divf %233, %234 : vector<2x32xf32>
    %236 = vector.extract_strided_slice %223 {offsets = [0, 64], sizes = [2, 32], strides = [1, 1]} : vector<2x128xf32> to vector<2x32xf32>
    %237 = math.tanh %236 : vector<2x32xf32>
    %238 = vector.extract_strided_slice %223 {offsets = [0, 96], sizes = [2, 32], strides = [1, 1]} : vector<2x128xf32> to vector<2x32xf32>
    %239 = arith.negf %238 : vector<2x32xf32>
    %240 = math.exp %239 : vector<2x32xf32>
    %cst_47 = arith.constant 1.000000e+00 : f32
    %241 = vector.broadcast %cst_47 : f32 to vector<2x32xf32>
    %242 = arith.addf %241, %240 : vector<2x32xf32>
    %243 = arith.divf %241, %242 : vector<2x32xf32>
    %244 = arith.mulf %235, %216 : vector<2x32xf32>
    %245 = arith.mulf %229, %237 : vector<2x32xf32>
    %246 = arith.addf %244, %245 : vector<2x32xf32>
    %247 = math.tanh %246 : vector<2x32xf32>
    %248 = arith.mulf %243, %247 : vector<2x32xf32>
    %c14 = arith.constant 14 : index
    %c0_48 = arith.constant 0 : index
    %249 = vector.load %arg4[%c14, %c0_48] : memref<16x32xf32, #tpu.memory_space<vmem>>, vector<2x32xf32>
    tpu.vector_store %arg4[%c14, %c0_48], %248 {strides = array<i32>} : memref<16x32xf32, #tpu.memory_space<vmem>>, vector<2x32xf32>,
    %c48 = arith.constant 48 : index
    %c0_49 = arith.constant 0 : index
    %250 = vector.load %arg1[%c48, %c0_49] : memref<496x128xbf16, #tpu.memory_space<vmem>>, vector<32x128xbf16>
    %c80 = arith.constant 80 : index
    %c0_50 = arith.constant 0 : index
    %251 = vector.load %arg1[%c80, %c0_50] : memref<496x128xbf16, #tpu.memory_space<vmem>>, vector<32x128xbf16>
    %c1 = arith.constant 1 : index
    %c0_51 = arith.constant 0 : index
    %252 = vector.load %arg2[%c1, %c0_51] : memref<4x128xf32, #tpu.memory_space<vmem>>, vector<1x128xf32>
    %c0_52 = arith.constant 0 : index
    %c0_53 = arith.constant 0 : index
    %253 = vector.load %arg4[%c0_52, %c0_53] : memref<16x32xf32, #tpu.memory_space<vmem>>, vector<16x32xf32>
    %254 = arith.truncf %253 : vector<16x32xf32> to vector<16x32xbf16>
    %cst_54 = arith.constant dense<0.000000e+00> : vector<16x128xf32>
    %255 = tpu.matmul %254, %250, %cst_54 {dimension_numbers = #tpu.dot_dimension_numbers<[1], [0], [0], [1], [0, 0, 1, 1], [], []>} : vector<16x32xbf16>, vector<32x128xbf16>, vector<16x128xf32> -> vector<16x128xf32>
    %256 = vector.broadcast %252 : vector<1x128xf32> to vector<16x128xf32>
    %257 = arith.addf %255, %256 : vector<16x128xf32>
    %cst_55 = arith.constant 0.000000e+00 : f32
    %258 = vector.broadcast %cst_55 : f32 to vector<2x32xf32>
    %cst_56 = arith.constant 0.000000e+00 : f32
    %259 = vector.broadcast %cst_56 : f32 to vector<2x32xf32>
    %cst_57 = arith.constant 0.000000e+00 : f32
    %260 = vector.broadcast %cst_57 : f32 to vector<2x128xf32>
    %261 = vector.extract_strided_slice %257 {offsets = [0, 0], sizes = [2, 128], strides = [1, 1]} : vector<16x128xf32> to vector<2x128xf32>
    %262 = arith.truncf %258 : vector<2x32xf32> to vector<2x32xbf16>
    %cst_58 = arith.constant dense<0.000000e+00> : vector<2x128xf32>
    %263 = tpu.matmul %262, %251, %cst_58 {dimension_numbers = #tpu.dot_dimension_numbers<[1], [0], [0], [1], [0, 0, 1, 1], [], []>} : vector<2x32xbf16>, vector<32x128xbf16>, vector<2x128xf32> -> vector<2x128xf32>
    %264 = arith.addf %261, %263 : vector<2x128xf32>
    %265 = vector.extract_strided_slice %264 {offsets = [0, 0], sizes = [2, 32], strides = [1, 1]} : vector<2x128xf32> to vector<2x32xf32>
    %266 = arith.negf %265 : vector<2x32xf32>
    %267 = math.exp %266 : vector<2x32xf32>
    %cst_59 = arith.constant 1.000000e+00 : f32
    %268 = vector.broadcast %cst_59 : f32 to vector<2x32xf32>
    %269 = arith.addf %268, %267 : vector<2x32xf32>
    %270 = arith.divf %268, %269 : vector<2x32xf32>
    %271 = vector.extract_strided_slice %264 {offsets = [0, 32], sizes = [2, 32], strides = [1, 1]} : vector<2x128xf32> to vector<2x32xf32>
    %272 = arith.negf %271 : vector<2x32xf32>
    %273 = math.exp %272 : vector<2x32xf32>
    %cst_60 = arith.constant 1.000000e+00 : f32
    %274 = vector.broadcast %cst_60 : f32 to vector<2x32xf32>
    %275 = arith.addf %274, %273 : vector<2x32xf32>
    %276 = arith.divf %274, %275 : vector<2x32xf32>
    %277 = vector.extract_strided_slice %264 {offsets = [0, 64], sizes = [2, 32], strides = [1, 1]} : vector<2x128xf32> to vector<2x32xf32>
    %278 = math.tanh %277 : vector<2x32xf32>
    %279 = vector.extract_strided_slice %264 {offsets = [0, 96], sizes = [2, 32], strides = [1, 1]} : vector<2x128xf32> to vector<2x32xf32>
    %280 = arith.negf %279 : vector<2x32xf32>
    %281 = math.exp %280 : vector<2x32xf32>
    %cst_61 = arith.constant 1.000000e+00 : f32
    %282 = vector.broadcast %cst_61 : f32 to vector<2x32xf32>
    %283 = arith.addf %282, %281 : vector<2x32xf32>
    %284 = arith.divf %282, %283 : vector<2x32xf32>
    %285 = arith.mulf %276, %259 : vector<2x32xf32>
    %286 = arith.mulf %270, %278 : vector<2x32xf32>
    %287 = arith.addf %285, %286 : vector<2x32xf32>
    %288 = math.tanh %287 : vector<2x32xf32>
    %289 = arith.mulf %284, %288 : vector<2x32xf32>
    %c112 = arith.constant 112 : index
    %c0_62 = arith.constant 0 : index
    %290 = vector.load %arg1[%c112, %c0_62] : memref<496x128xbf16, #tpu.memory_space<vmem>>, vector<32x128xbf16>
    %291 = math.tanh %289 : vector<2x32xf32>
    %292 = arith.truncf %291 : vector<2x32xf32> to vector<2x32xbf16>
    %cst_63 = arith.constant dense<0.000000e+00> : vector<2x128xf32>
    %293 = tpu.matmul %292, %290, %cst_63 {dimension_numbers = #tpu.dot_dimension_numbers<[1], [0], [0], [1], [0, 0, 1, 1], [], []>} : vector<2x32xbf16>, vector<32x128xbf16>, vector<2x128xf32> -> vector<2x128xf32>
    %294 = arith.addf %260, %293 : vector<2x128xf32>
    %295 = vector.extract_strided_slice %257 {offsets = [2, 0], sizes = [2, 128], strides = [1, 1]} : vector<16x128xf32> to vector<2x128xf32>
    %296 = arith.truncf %289 : vector<2x32xf32> to vector<2x32xbf16>
    %cst_64 = arith.constant dense<0.000000e+00> : vector<2x128xf32>
    %297 = tpu.matmul %296, %251, %cst_64 {dimension_numbers = #tpu.dot_dimension_numbers<[1], [0], [0], [1], [0, 0, 1, 1], [], []>} : vector<2x32xbf16>, vector<32x128xbf16>, vector<2x128xf32> -> vector<2x128xf32>
    %298 = arith.addf %295, %297 : vector<2x128xf32>
    %299 = vector.extract_strided_slice %298 {offsets = [0, 0], sizes = [2, 32], strides = [1, 1]} : vector<2x128xf32> to vector<2x32xf32>
    %300 = arith.negf %299 : vector<2x32xf32>
    %301 = math.exp %300 : vector<2x32xf32>
    %cst_65 = arith.constant 1.000000e+00 : f32
    %302 = vector.broadcast %cst_65 : f32 to vector<2x32xf32>
    %303 = arith.addf %302, %301 : vector<2x32xf32>
    %304 = arith.divf %302, %303 : vector<2x32xf32>
    %305 = vector.extract_strided_slice %298 {offsets = [0, 32], sizes = [2, 32], strides = [1, 1]} : vector<2x128xf32> to vector<2x32xf32>
    %306 = arith.negf %305 : vector<2x32xf32>
    %307 = math.exp %306 : vector<2x32xf32>
    %cst_66 = arith.constant 1.000000e+00 : f32
    %308 = vector.broadcast %cst_66 : f32 to vector<2x32xf32>
    %309 = arith.addf %308, %307 : vector<2x32xf32>
    %310 = arith.divf %308, %309 : vector<2x32xf32>
    %311 = vector.extract_strided_slice %298 {offsets = [0, 64], sizes = [2, 32], strides = [1, 1]} : vector<2x128xf32> to vector<2x32xf32>
    %312 = math.tanh %311 : vector<2x32xf32>
    %313 = vector.extract_strided_slice %298 {offsets = [0, 96], sizes = [2, 32], strides = [1, 1]} : vector<2x128xf32> to vector<2x32xf32>
    %314 = arith.negf %313 : vector<2x32xf32>
    %315 = math.exp %314 : vector<2x32xf32>
    %cst_67 = arith.constant 1.000000e+00 : f32
    %316 = vector.broadcast %cst_67 : f32 to vector<2x32xf32>
    %317 = arith.addf %316, %315 : vector<2x32xf32>
    %318 = arith.divf %316, %317 : vector<2x32xf32>
    %319 = arith.mulf %310, %287 : vector<2x32xf32>
    %320 = arith.mulf %304, %312 : vector<2x32xf32>
    %321 = arith.addf %319, %320 : vector<2x32xf32>
    %322 = math.tanh %321 : vector<2x32xf32>
    %323 = arith.mulf %318, %322 : vector<2x32xf32>
    %c144 = arith.constant 144 : index
    %c0_68 = arith.constant 0 : index
    %324 = vector.load %arg1[%c144, %c0_68] : memref<496x128xbf16, #tpu.memory_space<vmem>>, vector<32x128xbf16>
    %325 = math.tanh %323 : vector<2x32xf32>
    %326 = arith.truncf %325 : vector<2x32xf32> to vector<2x32xbf16>
    %cst_69 = arith.constant dense<0.000000e+00> : vector<2x128xf32>
    %327 = tpu.matmul %326, %324, %cst_69 {dimension_numbers = #tpu.dot_dimension_numbers<[1], [0], [0], [1], [0, 0, 1, 1], [], []>} : vector<2x32xbf16>, vector<32x128xbf16>, vector<2x128xf32> -> vector<2x128xf32>
    %328 = arith.addf %294, %327 : vector<2x128xf32>
    %329 = vector.extract_strided_slice %257 {offsets = [4, 0], sizes = [2, 128], strides = [1, 1]} : vector<16x128xf32> to vector<2x128xf32>
    %330 = arith.truncf %323 : vector<2x32xf32> to vector<2x32xbf16>
    %cst_70 = arith.constant dense<0.000000e+00> : vector<2x128xf32>
    %331 = tpu.matmul %330, %251, %cst_70 {dimension_numbers = #tpu.dot_dimension_numbers<[1], [0], [0], [1], [0, 0, 1, 1], [], []>} : vector<2x32xbf16>, vector<32x128xbf16>, vector<2x128xf32> -> vector<2x128xf32>
    %332 = arith.addf %329, %331 : vector<2x128xf32>
    %333 = vector.extract_strided_slice %332 {offsets = [0, 0], sizes = [2, 32], strides = [1, 1]} : vector<2x128xf32> to vector<2x32xf32>
    %334 = arith.negf %333 : vector<2x32xf32>
    %335 = math.exp %334 : vector<2x32xf32>
    %cst_71 = arith.constant 1.000000e+00 : f32
    %336 = vector.broadcast %cst_71 : f32 to vector<2x32xf32>
    %337 = arith.addf %336, %335 : vector<2x32xf32>
    %338 = arith.divf %336, %337 : vector<2x32xf32>
    %339 = vector.extract_strided_slice %332 {offsets = [0, 32], sizes = [2, 32], strides = [1, 1]} : vector<2x128xf32> to vector<2x32xf32>
    %340 = arith.negf %339 : vector<2x32xf32>
    %341 = math.exp %340 : vector<2x32xf32>
    %cst_72 = arith.constant 1.000000e+00 : f32
    %342 = vector.broadcast %cst_72 : f32 to vector<2x32xf32>
    %343 = arith.addf %342, %341 : vector<2x32xf32>
    %344 = arith.divf %342, %343 : vector<2x32xf32>
    %345 = vector.extract_strided_slice %332 {offsets = [0, 64], sizes = [2, 32], strides = [1, 1]} : vector<2x128xf32> to vector<2x32xf32>
    %346 = math.tanh %345 : vector<2x32xf32>
    %347 = vector.extract_strided_slice %332 {offsets = [0, 96], sizes = [2, 32], strides = [1, 1]} : vector<2x128xf32> to vector<2x32xf32>
    %348 = arith.negf %347 : vector<2x32xf32>
    %349 = math.exp %348 : vector<2x32xf32>
    %cst_73 = arith.constant 1.000000e+00 : f32
    %350 = vector.broadcast %cst_73 : f32 to vector<2x32xf32>
    %351 = arith.addf %350, %349 : vector<2x32xf32>
    %352 = arith.divf %350, %351 : vector<2x32xf32>
    %353 = arith.mulf %344, %321 : vector<2x32xf32>
    %354 = arith.mulf %338, %346 : vector<2x32xf32>
    %355 = arith.addf %353, %354 : vector<2x32xf32>
    %356 = math.tanh %355 : vector<2x32xf32>
    %357 = arith.mulf %352, %356 : vector<2x32xf32>
    %c176 = arith.constant 176 : index
    %c0_74 = arith.constant 0 : index
    %358 = vector.load %arg1[%c176, %c0_74] : memref<496x128xbf16, #tpu.memory_space<vmem>>, vector<32x128xbf16>
    %359 = math.tanh %357 : vector<2x32xf32>
    %360 = arith.truncf %359 : vector<2x32xf32> to vector<2x32xbf16>
    %cst_75 = arith.constant dense<0.000000e+00> : vector<2x128xf32>
    %361 = tpu.matmul %360, %358, %cst_75 {dimension_numbers = #tpu.dot_dimension_numbers<[1], [0], [0], [1], [0, 0, 1, 1], [], []>} : vector<2x32xbf16>, vector<32x128xbf16>, vector<2x128xf32> -> vector<2x128xf32>
    %362 = arith.addf %328, %361 : vector<2x128xf32>
    %363 = vector.extract_strided_slice %257 {offsets = [6, 0], sizes = [2, 128], strides = [1, 1]} : vector<16x128xf32> to vector<2x128xf32>
    %364 = arith.truncf %357 : vector<2x32xf32> to vector<2x32xbf16>
    %cst_76 = arith.constant dense<0.000000e+00> : vector<2x128xf32>
    %365 = tpu.matmul %364, %251, %cst_76 {dimension_numbers = #tpu.dot_dimension_numbers<[1], [0], [0], [1], [0, 0, 1, 1], [], []>} : vector<2x32xbf16>, vector<32x128xbf16>, vector<2x128xf32> -> vector<2x128xf32>
    %366 = arith.addf %363, %365 : vector<2x128xf32>
    %367 = vector.extract_strided_slice %366 {offsets = [0, 0], sizes = [2, 32], strides = [1, 1]} : vector<2x128xf32> to vector<2x32xf32>
    %368 = arith.negf %367 : vector<2x32xf32>
    %369 = math.exp %368 : vector<2x32xf32>
    %cst_77 = arith.constant 1.000000e+00 : f32
    %370 = vector.broadcast %cst_77 : f32 to vector<2x32xf32>
    %371 = arith.addf %370, %369 : vector<2x32xf32>
    %372 = arith.divf %370, %371 : vector<2x32xf32>
    %373 = vector.extract_strided_slice %366 {offsets = [0, 32], sizes = [2, 32], strides = [1, 1]} : vector<2x128xf32> to vector<2x32xf32>
    %374 = arith.negf %373 : vector<2x32xf32>
    %375 = math.exp %374 : vector<2x32xf32>
    %cst_78 = arith.constant 1.000000e+00 : f32
    %376 = vector.broadcast %cst_78 : f32 to vector<2x32xf32>
    %377 = arith.addf %376, %375 : vector<2x32xf32>
    %378 = arith.divf %376, %377 : vector<2x32xf32>
    %379 = vector.extract_strided_slice %366 {offsets = [0, 64], sizes = [2, 32], strides = [1, 1]} : vector<2x128xf32> to vector<2x32xf32>
    %380 = math.tanh %379 : vector<2x32xf32>
    %381 = vector.extract_strided_slice %366 {offsets = [0, 96], sizes = [2, 32], strides = [1, 1]} : vector<2x128xf32> to vector<2x32xf32>
    %382 = arith.negf %381 : vector<2x32xf32>
    %383 = math.exp %382 : vector<2x32xf32>
    %cst_79 = arith.constant 1.000000e+00 : f32
    %384 = vector.broadcast %cst_79 : f32 to vector<2x32xf32>
    %385 = arith.addf %384, %383 : vector<2x32xf32>
    %386 = arith.divf %384, %385 : vector<2x32xf32>
    %387 = arith.mulf %378, %355 : vector<2x32xf32>
    %388 = arith.mulf %372, %380 : vector<2x32xf32>
    %389 = arith.addf %387, %388 : vector<2x32xf32>
    %390 = math.tanh %389 : vector<2x32xf32>
    %391 = arith.mulf %386, %390 : vector<2x32xf32>
    %c208 = arith.constant 208 : index
    %c0_80 = arith.constant 0 : index
    %392 = vector.load %arg1[%c208, %c0_80] : memref<496x128xbf16, #tpu.memory_space<vmem>>, vector<32x128xbf16>
    %393 = math.tanh %391 : vector<2x32xf32>
    %394 = arith.truncf %393 : vector<2x32xf32> to vector<2x32xbf16>
    %cst_81 = arith.constant dense<0.000000e+00> : vector<2x128xf32>
    %395 = tpu.matmul %394, %392, %cst_81 {dimension_numbers = #tpu.dot_dimension_numbers<[1], [0], [0], [1], [0, 0, 1, 1], [], []>} : vector<2x32xbf16>, vector<32x128xbf16>, vector<2x128xf32> -> vector<2x128xf32>
    %396 = arith.addf %362, %395 : vector<2x128xf32>
    %397 = vector.extract_strided_slice %257 {offsets = [8, 0], sizes = [2, 128], strides = [1, 1]} : vector<16x128xf32> to vector<2x128xf32>
    %398 = arith.truncf %391 : vector<2x32xf32> to vector<2x32xbf16>
    %cst_82 = arith.constant dense<0.000000e+00> : vector<2x128xf32>
    %399 = tpu.matmul %398, %251, %cst_82 {dimension_numbers = #tpu.dot_dimension_numbers<[1], [0], [0], [1], [0, 0, 1, 1], [], []>} : vector<2x32xbf16>, vector<32x128xbf16>, vector<2x128xf32> -> vector<2x128xf32>
    %400 = arith.addf %397, %399 : vector<2x128xf32>
    %401 = vector.extract_strided_slice %400 {offsets = [0, 0], sizes = [2, 32], strides = [1, 1]} : vector<2x128xf32> to vector<2x32xf32>
    %402 = arith.negf %401 : vector<2x32xf32>
    %403 = math.exp %402 : vector<2x32xf32>
    %cst_83 = arith.constant 1.000000e+00 : f32
    %404 = vector.broadcast %cst_83 : f32 to vector<2x32xf32>
    %405 = arith.addf %404, %403 : vector<2x32xf32>
    %406 = arith.divf %404, %405 : vector<2x32xf32>
    %407 = vector.extract_strided_slice %400 {offsets = [0, 32], sizes = [2, 32], strides = [1, 1]} : vector<2x128xf32> to vector<2x32xf32>
    %408 = arith.negf %407 : vector<2x32xf32>
    %409 = math.exp %408 : vector<2x32xf32>
    %cst_84 = arith.constant 1.000000e+00 : f32
    %410 = vector.broadcast %cst_84 : f32 to vector<2x32xf32>
    %411 = arith.addf %410, %409 : vector<2x32xf32>
    %412 = arith.divf %410, %411 : vector<2x32xf32>
    %413 = vector.extract_strided_slice %400 {offsets = [0, 64], sizes = [2, 32], strides = [1, 1]} : vector<2x128xf32> to vector<2x32xf32>
    %414 = math.tanh %413 : vector<2x32xf32>
    %415 = vector.extract_strided_slice %400 {offsets = [0, 96], sizes = [2, 32], strides = [1, 1]} : vector<2x128xf32> to vector<2x32xf32>
    %416 = arith.negf %415 : vector<2x32xf32>
    %417 = math.exp %416 : vector<2x32xf32>
    %cst_85 = arith.constant 1.000000e+00 : f32
    %418 = vector.broadcast %cst_85 : f32 to vector<2x32xf32>
    %419 = arith.addf %418, %417 : vector<2x32xf32>
    %420 = arith.divf %418, %419 : vector<2x32xf32>
    %421 = arith.mulf %412, %389 : vector<2x32xf32>
    %422 = arith.mulf %406, %414 : vector<2x32xf32>
    %423 = arith.addf %421, %422 : vector<2x32xf32>
    %424 = math.tanh %423 : vector<2x32xf32>
    %425 = arith.mulf %420, %424 : vector<2x32xf32>
    %c240 = arith.constant 240 : index
    %c0_86 = arith.constant 0 : index
    %426 = vector.load %arg1[%c240, %c0_86] : memref<496x128xbf16, #tpu.memory_space<vmem>>, vector<32x128xbf16>
    %427 = math.tanh %425 : vector<2x32xf32>
    %428 = arith.truncf %427 : vector<2x32xf32> to vector<2x32xbf16>
    %cst_87 = arith.constant dense<0.000000e+00> : vector<2x128xf32>
    %429 = tpu.matmul %428, %426, %cst_87 {dimension_numbers = #tpu.dot_dimension_numbers<[1], [0], [0], [1], [0, 0, 1, 1], [], []>} : vector<2x32xbf16>, vector<32x128xbf16>, vector<2x128xf32> -> vector<2x128xf32>
    %430 = arith.addf %396, %429 : vector<2x128xf32>
    %431 = vector.extract_strided_slice %257 {offsets = [10, 0], sizes = [2, 128], strides = [1, 1]} : vector<16x128xf32> to vector<2x128xf32>
    %432 = arith.truncf %425 : vector<2x32xf32> to vector<2x32xbf16>
    %cst_88 = arith.constant dense<0.000000e+00> : vector<2x128xf32>
    %433 = tpu.matmul %432, %251, %cst_88 {dimension_numbers = #tpu.dot_dimension_numbers<[1], [0], [0], [1], [0, 0, 1, 1], [], []>} : vector<2x32xbf16>, vector<32x128xbf16>, vector<2x128xf32> -> vector<2x128xf32>
    %434 = arith.addf %431, %433 : vector<2x128xf32>
    %435 = vector.extract_strided_slice %434 {offsets = [0, 0], sizes = [2, 32], strides = [1, 1]} : vector<2x128xf32> to vector<2x32xf32>
    %436 = arith.negf %435 : vector<2x32xf32>
    %437 = math.exp %436 : vector<2x32xf32>
    %cst_89 = arith.constant 1.000000e+00 : f32
    %438 = vector.broadcast %cst_89 : f32 to vector<2x32xf32>
    %439 = arith.addf %438, %437 : vector<2x32xf32>
    %440 = arith.divf %438, %439 : vector<2x32xf32>
    %441 = vector.extract_strided_slice %434 {offsets = [0, 32], sizes = [2, 32], strides = [1, 1]} : vector<2x128xf32> to vector<2x32xf32>
    %442 = arith.negf %441 : vector<2x32xf32>
    %443 = math.exp %442 : vector<2x32xf32>
    %cst_90 = arith.constant 1.000000e+00 : f32
    %444 = vector.broadcast %cst_90 : f32 to vector<2x32xf32>
    %445 = arith.addf %444, %443 : vector<2x32xf32>
    %446 = arith.divf %444, %445 : vector<2x32xf32>
    %447 = vector.extract_strided_slice %434 {offsets = [0, 64], sizes = [2, 32], strides = [1, 1]} : vector<2x128xf32> to vector<2x32xf32>
    %448 = math.tanh %447 : vector<2x32xf32>
    %449 = vector.extract_strided_slice %434 {offsets = [0, 96], sizes = [2, 32], strides = [1, 1]} : vector<2x128xf32> to vector<2x32xf32>
    %450 = arith.negf %449 : vector<2x32xf32>
    %451 = math.exp %450 : vector<2x32xf32>
    %cst_91 = arith.constant 1.000000e+00 : f32
    %452 = vector.broadcast %cst_91 : f32 to vector<2x32xf32>
    %453 = arith.addf %452, %451 : vector<2x32xf32>
    %454 = arith.divf %452, %453 : vector<2x32xf32>
    %455 = arith.mulf %446, %423 : vector<2x32xf32>
    %456 = arith.mulf %440, %448 : vector<2x32xf32>
    %457 = arith.addf %455, %456 : vector<2x32xf32>
    %458 = math.tanh %457 : vector<2x32xf32>
    %459 = arith.mulf %454, %458 : vector<2x32xf32>
    %c272 = arith.constant 272 : index
    %c0_92 = arith.constant 0 : index
    %460 = vector.load %arg1[%c272, %c0_92] : memref<496x128xbf16, #tpu.memory_space<vmem>>, vector<32x128xbf16>
    %461 = math.tanh %459 : vector<2x32xf32>
    %462 = arith.truncf %461 : vector<2x32xf32> to vector<2x32xbf16>
    %cst_93 = arith.constant dense<0.000000e+00> : vector<2x128xf32>
    %463 = tpu.matmul %462, %460, %cst_93 {dimension_numbers = #tpu.dot_dimension_numbers<[1], [0], [0], [1], [0, 0, 1, 1], [], []>} : vector<2x32xbf16>, vector<32x128xbf16>, vector<2x128xf32> -> vector<2x128xf32>
    %464 = arith.addf %430, %463 : vector<2x128xf32>
    %465 = vector.extract_strided_slice %257 {offsets = [12, 0], sizes = [2, 128], strides = [1, 1]} : vector<16x128xf32> to vector<2x128xf32>
    %466 = arith.truncf %459 : vector<2x32xf32> to vector<2x32xbf16>
    %cst_94 = arith.constant dense<0.000000e+00> : vector<2x128xf32>
    %467 = tpu.matmul %466, %251, %cst_94 {dimension_numbers = #tpu.dot_dimension_numbers<[1], [0], [0], [1], [0, 0, 1, 1], [], []>} : vector<2x32xbf16>, vector<32x128xbf16>, vector<2x128xf32> -> vector<2x128xf32>
    %468 = arith.addf %465, %467 : vector<2x128xf32>
    %469 = vector.extract_strided_slice %468 {offsets = [0, 0], sizes = [2, 32], strides = [1, 1]} : vector<2x128xf32> to vector<2x32xf32>
    %470 = arith.negf %469 : vector<2x32xf32>
    %471 = math.exp %470 : vector<2x32xf32>
    %cst_95 = arith.constant 1.000000e+00 : f32
    %472 = vector.broadcast %cst_95 : f32 to vector<2x32xf32>
    %473 = arith.addf %472, %471 : vector<2x32xf32>
    %474 = arith.divf %472, %473 : vector<2x32xf32>
    %475 = vector.extract_strided_slice %468 {offsets = [0, 32], sizes = [2, 32], strides = [1, 1]} : vector<2x128xf32> to vector<2x32xf32>
    %476 = arith.negf %475 : vector<2x32xf32>
    %477 = math.exp %476 : vector<2x32xf32>
    %cst_96 = arith.constant 1.000000e+00 : f32
    %478 = vector.broadcast %cst_96 : f32 to vector<2x32xf32>
    %479 = arith.addf %478, %477 : vector<2x32xf32>
    %480 = arith.divf %478, %479 : vector<2x32xf32>
    %481 = vector.extract_strided_slice %468 {offsets = [0, 64], sizes = [2, 32], strides = [1, 1]} : vector<2x128xf32> to vector<2x32xf32>
    %482 = math.tanh %481 : vector<2x32xf32>
    %483 = vector.extract_strided_slice %468 {offsets = [0, 96], sizes = [2, 32], strides = [1, 1]} : vector<2x128xf32> to vector<2x32xf32>
    %484 = arith.negf %483 : vector<2x32xf32>
    %485 = math.exp %484 : vector<2x32xf32>
    %cst_97 = arith.constant 1.000000e+00 : f32
    %486 = vector.broadcast %cst_97 : f32 to vector<2x32xf32>
    %487 = arith.addf %486, %485 : vector<2x32xf32>
    %488 = arith.divf %486, %487 : vector<2x32xf32>
    %489 = arith.mulf %480, %457 : vector<2x32xf32>
    %490 = arith.mulf %474, %482 : vector<2x32xf32>
    %491 = arith.addf %489, %490 : vector<2x32xf32>
    %492 = math.tanh %491 : vector<2x32xf32>
    %493 = arith.mulf %488, %492 : vector<2x32xf32>
    %c304 = arith.constant 304 : index
    %c0_98 = arith.constant 0 : index
    %494 = vector.load %arg1[%c304, %c0_98] : memref<496x128xbf16, #tpu.memory_space<vmem>>, vector<32x128xbf16>
    %495 = math.tanh %493 : vector<2x32xf32>
    %496 = arith.truncf %495 : vector<2x32xf32> to vector<2x32xbf16>
    %cst_99 = arith.constant dense<0.000000e+00> : vector<2x128xf32>
    %497 = tpu.matmul %496, %494, %cst_99 {dimension_numbers = #tpu.dot_dimension_numbers<[1], [0], [0], [1], [0, 0, 1, 1], [], []>} : vector<2x32xbf16>, vector<32x128xbf16>, vector<2x128xf32> -> vector<2x128xf32>
    %498 = arith.addf %464, %497 : vector<2x128xf32>
    %499 = vector.extract_strided_slice %257 {offsets = [14, 0], sizes = [2, 128], strides = [1, 1]} : vector<16x128xf32> to vector<2x128xf32>
    %500 = arith.truncf %493 : vector<2x32xf32> to vector<2x32xbf16>
    %cst_100 = arith.constant dense<0.000000e+00> : vector<2x128xf32>
    %501 = tpu.matmul %500, %251, %cst_100 {dimension_numbers = #tpu.dot_dimension_numbers<[1], [0], [0], [1], [0, 0, 1, 1], [], []>} : vector<2x32xbf16>, vector<32x128xbf16>, vector<2x128xf32> -> vector<2x128xf32>
    %502 = arith.addf %499, %501 : vector<2x128xf32>
    %503 = vector.extract_strided_slice %502 {offsets = [0, 0], sizes = [2, 32], strides = [1, 1]} : vector<2x128xf32> to vector<2x32xf32>
    %504 = arith.negf %503 : vector<2x32xf32>
    %505 = math.exp %504 : vector<2x32xf32>
    %cst_101 = arith.constant 1.000000e+00 : f32
    %506 = vector.broadcast %cst_101 : f32 to vector<2x32xf32>
    %507 = arith.addf %506, %505 : vector<2x32xf32>
    %508 = arith.divf %506, %507 : vector<2x32xf32>
    %509 = vector.extract_strided_slice %502 {offsets = [0, 32], sizes = [2, 32], strides = [1, 1]} : vector<2x128xf32> to vector<2x32xf32>
    %510 = arith.negf %509 : vector<2x32xf32>
    %511 = math.exp %510 : vector<2x32xf32>
    %cst_102 = arith.constant 1.000000e+00 : f32
    %512 = vector.broadcast %cst_102 : f32 to vector<2x32xf32>
    %513 = arith.addf %512, %511 : vector<2x32xf32>
    %514 = arith.divf %512, %513 : vector<2x32xf32>
    %515 = vector.extract_strided_slice %502 {offsets = [0, 64], sizes = [2, 32], strides = [1, 1]} : vector<2x128xf32> to vector<2x32xf32>
    %516 = math.tanh %515 : vector<2x32xf32>
    %517 = vector.extract_strided_slice %502 {offsets = [0, 96], sizes = [2, 32], strides = [1, 1]} : vector<2x128xf32> to vector<2x32xf32>
    %518 = arith.negf %517 : vector<2x32xf32>
    %519 = math.exp %518 : vector<2x32xf32>
    %cst_103 = arith.constant 1.000000e+00 : f32
    %520 = vector.broadcast %cst_103 : f32 to vector<2x32xf32>
    %521 = arith.addf %520, %519 : vector<2x32xf32>
    %522 = arith.divf %520, %521 : vector<2x32xf32>
    %523 = arith.mulf %514, %491 : vector<2x32xf32>
    %524 = arith.mulf %508, %516 : vector<2x32xf32>
    %525 = arith.addf %523, %524 : vector<2x32xf32>
    %526 = math.tanh %525 : vector<2x32xf32>
    %527 = arith.mulf %522, %526 : vector<2x32xf32>
    %c336 = arith.constant 336 : index
    %c0_104 = arith.constant 0 : index
    %528 = vector.load %arg1[%c336, %c0_104] : memref<496x128xbf16, #tpu.memory_space<vmem>>, vector<32x128xbf16>
    %529 = math.tanh %527 : vector<2x32xf32>
    %530 = arith.truncf %529 : vector<2x32xf32> to vector<2x32xbf16>
    %cst_105 = arith.constant dense<0.000000e+00> : vector<2x128xf32>
    %531 = tpu.matmul %530, %528, %cst_105 {dimension_numbers = #tpu.dot_dimension_numbers<[1], [0], [0], [1], [0, 0, 1, 1], [], []>} : vector<2x32xbf16>, vector<32x128xbf16>, vector<2x128xf32> -> vector<2x128xf32>
    %532 = arith.addf %498, %531 : vector<2x128xf32>
    %c2_106 = arith.constant 2 : index
    %c0_107 = arith.constant 0 : index
    %533 = vector.load %arg2[%c2_106, %c0_107] : memref<4x128xf32, #tpu.memory_space<vmem>>, vector<1x128xf32>
    %c3 = arith.constant 3 : index
    %c0_108 = arith.constant 0 : index
    %534 = vector.load %arg2[%c3, %c0_108] : memref<4x128xf32, #tpu.memory_space<vmem>>, vector<1x128xf32>
    %535 = vector.broadcast %533 : vector<1x128xf32> to vector<2x128xf32>
    %536 = arith.addf %532, %535 : vector<2x128xf32>
    %537 = arith.negf %536 : vector<2x128xf32>
    %538 = math.exp %537 : vector<2x128xf32>
    %cst_109 = arith.constant 1.000000e+00 : f32
    %539 = vector.broadcast %cst_109 : f32 to vector<2x128xf32>
    %540 = arith.addf %539, %538 : vector<2x128xf32>
    %541 = arith.divf %539, %540 : vector<2x128xf32>
    %c368 = arith.constant 368 : index
    %c0_110 = arith.constant 0 : index
    %542 = vector.load %arg1[%c368, %c0_110] : memref<496x128xbf16, #tpu.memory_space<vmem>>, vector<128x128xbf16>
    %543 = arith.truncf %541 : vector<2x128xf32> to vector<2x128xbf16>
    %cst_111 = arith.constant dense<0.000000e+00> : vector<2x128xf32>
    %544 = tpu.matmul %543, %542, %cst_111 {dimension_numbers = #tpu.dot_dimension_numbers<[1], [0], [0], [1], [0, 0, 1, 1], [], []>} : vector<2x128xbf16>, vector<128x128xbf16>, vector<2x128xf32> -> vector<2x128xf32>
    %545 = vector.broadcast %534 : vector<1x128xf32> to vector<2x128xf32>
    %546 = arith.addf %544, %545 : vector<2x128xf32>
    %547 = vector.extract_strided_slice %546 {offsets = [0, 0], sizes = [2, 15], strides = [1, 1]} : vector<2x128xf32> to vector<2x15xf32>
    %c0_112 = arith.constant 0 : index
    %c0_113 = arith.constant 0 : index
    %548 = vector.load %arg3[%c0_112, %c0_113] : memref<2x15xf32, #tpu.memory_space<vmem>>, vector<2x15xf32>
    tpu.vector_store %arg3[%c0_112, %c0_113], %547 {strides = array<i32>} : memref<2x15xf32, #tpu.memory_space<vmem>>, vector<2x15xf32>,
    return
  }
}

</mosaic_0001>

<llo_original>
// kernel: tpu_custom_call.1
$region0: #{tpu_custom_call.1}
  #allocation0 [shape = 'u32[]', space=smem, size = 0x4, offset = 0x4, fixed_abs, tag = 'smem constant byte address 0x4 - core index']
  #allocation1 [shape = 'u32[72,128]{1,0:T(1,128)}', space=vmem, size = 0x9000, scoped, tag = 'internal scratch']
  #allocation2 [shape = 'f32[16,32]{1,0:T(8,128)}', space=vmem, size = 0x2000, scoped, tag = 'scratch operand']
  %s0 = inlined_call_operand.hbm [shape: f32[16,16], index: 0, kind: input, shape index: {}]
  %s1 = inlined_call_operand.hbm [shape: bf16[496,128], index: 1, kind: input, shape index: {}]
  %s2 = inlined_call_operand.hbm [shape: f32[4,128], index: 2, kind: input, shape index: {}]
  %s3 = inlined_call_operand.hbm [shape: f32[2,15], index: 3, kind: output, shape index: {}]
  %s4 = sld [smem:[#allocation0]]
  $region34: #{tpu_custom_call.1} parent=0
    _
  %s6 = ssub.s32 1, %s4
  %s7 = scalar_select 0, %s6, %s4
  $region1: #{tpu_custom_call.1} parent=0
    #allocation3 [shape = 'u8[8192]{0}', space=vmem, size = 0x2000, scoped, tag = 'input window, operand 0, single buffered']
    #allocation4 [shape = 's32[1]{0}', space=sflag, size = 0x4, scoped, tag = 'scoped memory for tpu_custom_call.1']
    #allocation5 [shape = 's32[1]{0}', space=sflag, size = 0x4, scoped, tag = 'scoped memory for tpu_custom_call.1']
    #allocation6 [shape = 'u8[126976]{0}', space=vmem, size = 0x1f000, scoped, tag = 'input window, operand 1, single buffered']
    #allocation7 [shape = 's32[1]{0}', space=sflag, size = 0x4, scoped, tag = 'scoped memory for tpu_custom_call.1']
    #allocation8 [shape = 'u8[2048]{0}', space=vmem, size = 0x800, scoped, tag = 'input window, operand 2, single buffered']
    #allocation9 [shape = 'u8[1024]{0}', space=vmem, size = 0x400, scoped, tag = 'output window, operand 0, single buffered']
    %8 = vsyncpa [#allocation4], 0
    %9 = vsyncpa [#allocation7], 0
    %10 = vsyncpa [#allocation5], 0
    // Predicated region
    $region2: #{tpu_custom_call.1} parent=1 // pred_check
      _
    $region3: #{tpu_custom_call.1} parent=1 // pred_check_branch
      %12 = sbr.rel (0) target = $region5
    $region4: #{tpu_custom_call.1} parent=1 // pred_region
      %14 = vsyncadd [#allocation4], 0
      %s15 = sshll.u32 %s0, 4
      %s16 = int_to_ptr.hbm [resolvable:$true] %s15
      %s17 = sshll.u32 [#allocation3], 4
      %s18 = int_to_ptr.vmem [resolvable:$true] %s17
      %23 = dma.hbm_to_vmem [thread:$0]  %s16, 256, %s18, [#allocation4], 128, 128, 8
    $region5: #{tpu_custom_call.1} parent=1 // pred_fallthru
      _
    // Predicated region
    $region6: #{tpu_custom_call.1} parent=1 // pred_check
      _
    $region7: #{tpu_custom_call.1} parent=1 // pred_check_branch
      %25 = sbr.rel (0) target = $region9
    $region8: #{tpu_custom_call.1} parent=1 // pred_region
      %27 = vsyncadd [#allocation7], 0
      %s28 = sshll.u32 %s1, 4
      %s29 = int_to_ptr.hbm [resolvable:$true] %s28
      %s30 = sshll.u32 [#allocation6], 4
      %s31 = int_to_ptr.vmem [resolvable:$true] %s30
      %36 = dma.hbm_to_vmem [thread:$0]  %s29, 3968, %s31, [#allocation7], 64, 64, 4
    $region9: #{tpu_custom_call.1} parent=1 // pred_fallthru
      _
    // Predicated region
    $region10: #{tpu_custom_call.1} parent=1 // pred_check
      _
    $region11: #{tpu_custom_call.1} parent=1 // pred_check_branch
      %38 = sbr.rel (0) target = $region13
    $region12: #{tpu_custom_call.1} parent=1 // pred_region
      %40 = vsyncadd [#allocation7], 0
      %s42 = sshll.u32 %s2, 4
      %s43 = int_to_ptr.hbm [resolvable:$true] %s42
      %s44 = sshll.u32 [#allocation8], 4
      %s45 = int_to_ptr.vmem [resolvable:$true] %s44
      %47 = dma.hbm_to_vmem [thread:$0]  %s43, 64, %s45, [#allocation7]
    $region13: #{tpu_custom_call.1} parent=1 // pred_fallthru
      _
    // Predicated region
    $region14: #{tpu_custom_call.1} parent=1 // pred_check
      _
    $region15: #{tpu_custom_call.1} parent=1 // pred_check_branch
      %49 = sbr.rel (0) target = $region17
    $region16: #{tpu_custom_call.1} parent=1 // pred_region
      %51 = dma.done [#allocation4], 256
    $region17: #{tpu_custom_call.1} parent=1 // pred_fallthru
      _
    // Predicated region
    $region18: #{tpu_custom_call.1} parent=1 // pred_check
      _
    $region19: #{tpu_custom_call.1} parent=1 // pred_check_branch
      %53 = sbr.rel (0) target = $region21
    $region20: #{tpu_custom_call.1} parent=1 // pred_region
      %55 = dma.done [#allocation7], 3968
    $region21: #{tpu_custom_call.1} parent=1 // pred_fallthru
      _
    // Predicated region
    $region22: #{tpu_custom_call.1} parent=1 // pred_check
      _
    $region23: #{tpu_custom_call.1} parent=1 // pred_check_branch
      %57 = sbr.rel (0) target = $region25
    $region24: #{tpu_custom_call.1} parent=1 // pred_region
      %59 = dma.done [#allocation7], 64
    $region25: #{tpu_custom_call.1} parent=1 // pred_fallthru
      _
    %v61 = vld [vmem:[#allocation6] sm:$0xf]
    %v62 = vld [vmem:[#allocation6 + $0x4] sm:$0xf]
    %v63 = vld [vmem:[#allocation6 + $0x8] sm:$0xf]
    %v64 = vld [vmem:[#allocation6 + $0xc] sm:$0xf]
    %v65 = vld [vmem:[#allocation6 + $0x10] sm:$0xf]
    %v66 = vld [vmem:[#allocation6 + $0x14] sm:$0xf]
    %v67 = vld [vmem:[#allocation8] sm:$0x1]
    %v68 = vld [vmem:[#allocation3] sm:$0xff]
    %v69 = vld [vmem:[#allocation3 + $0x8] sm:$0xff]
    %v70 = vpack.c.bf16 %v69, %v68
    %v71 = vperm.slane %v67, 0
    %v74 = vunpack.c.l.b16 %v61
    %v75 = vunpack.c.l.b16 %v62
    %v76 = vpack.c.b16 %v75, %v74
    %vm78 = vcmask 130048
    %v80 = vsel %vm78, %v70, 0
    %82 = vmatpush.bf16.msra.mxu0 0
    %83 = vmatpush.bf16.msra.mxu0 0
    %84 = vmatpush.bf16.msra.mxu0 0
    %85 = vmatpush.bf16.msra.mxu0 0
    %86 = vmatpush.bf16.msra.mxu0 0
    %87 = vmatpush.bf16.msra.mxu0 0
    %88 = vmatpush.bf16.msra.mxu0 0
    %89 = vmatpush.bf16.msra.mxu0 %v76
    %90 = vmatmul.bf16.gmra.mxu0 %v80
    %v91 = vpop.f32.mrf.mxu0
    %v92 = vadd.f32 %v71, %v91
    %v93 = vpop.f32.mrf.mxu0
    %v94 = vadd.f32 %v71, %v93
    %95 = vdwg.mxu0
    %v100 = vunpack.c.l.b16 %v63
    %v101 = vunpack.c.l.b16 %v64
    %v102 = vunpack.c.l.b16 %v65
    %v103 = vunpack.c.l.b16 %v66
    %v104 = vpack.c.b16 %v101, %v100
    %v105 = vpack.c.b16 %v103, %v102
    %vm108 = vcmask 261120
    %v110 = vsel %vm108, 0, 0
    %112 = vmatpush.bf16.msra.mxu0 0
    %113 = vmatpush.bf16.msra.mxu0 0
    %114 = vmatpush.bf16.msra.mxu0 0
    %115 = vmatpush.bf16.msra.mxu0 0
    %116 = vmatpush.bf16.msra.mxu0 0
    %117 = vmatpush.bf16.msra.mxu0 0
    %118 = vmatpush.bf16.msra.mxu0 %v105
    %119 = vmatpush.bf16.msra.mxu0 %v104
    %120 = vmatmul.bf16.gmra.mxu0 %v110
    %v121 = vpop.f32.mrf.mxu0
    %v122 = vadd.f32 0.0, %v121
    %v123 = vpop.f32.mrf.mxu0
    %124 = vdwg.mxu0
    %v125 = vadd.f32 %v92, %v122
    %v126 = vxor.u32 %v125, 2147483648
    %v127 = vmul.f32 %v126, 1.442695
    %v128 = vpow.pop %v127
    %v129 = vadd.f32 %v128, 1.0
    %v130 = vrcp.pop %v129
    %v131 = vmul.f32 %v129, %v130
    %v132 = vsub.f32 1.0, %v131
    %v133 = vmul.f32 %v130, %v132
    %v134 = vadd.f32 %v130, %v133
    %vm135 = vweird.f32 %v129
    %vm136 = vweird.f32 %v130
    %vm137 = vmor %vm135, %vm136
    %v138 = vsel %vm137, %v130, %v134
    %v139 = vand.u32 2147483647, %v129
    %vm140 = vcmp.eq.f32.partialorder %v139, 8.507059e+37
    %v141 = vand.u32 %v129, 2147483648
    %v142 = vor.u32 1.1754944e-38, %v141
    %v143 = vsel %vm140, %v142, %v138
    %v144 = vmul.f32 1.0, %v143
    %v145 = vtanh.pop %v125
    %v146 = vmul.f32 %v144, 0.0
    %148 = vrot.lane.b32.xlu0 %v145, 64
    %v149 = vpop.permute.xlu0 %148
    %v151 = vmul.f32 %v144, %v149
    %153 = vrot.lane.b32.xlu0 %v151, 32
    %v154 = vpop.permute.xlu0 %153
    %v156 = vadd.f32 %v146, %v154
    %v157 = vtanh.pop %v156
    %159 = vrot.lane.b32.xlu0 %v157, 64
    %v160 = vpop.permute.xlu0 %159
    %v162 = vmul.f32 %v144, %v160
    %164 = vrot.lane.b32.xlu0 %v162, 32
    %v165 = vpop.permute.xlu0 %164
    %vm167 = vcmask 254976
    %168 = vst.msk [vmem:[#allocation2] sm:$0x3] %vm167, %v165
    %v169 = vpack.c.bf16 %v162, %v162
    %171 = vrot.lane.b32.xlu0 %v169, 32
    %v172 = vpop.permute.xlu0 %171
    %v174 = vsel %vm108, %v172, 0
    %176 = vmatpush.bf16.msra.mxu0 0
    %177 = vmatpush.bf16.msra.mxu0 0
    %178 = vmatpush.bf16.msra.mxu0 0
    %179 = vmatpush.bf16.msra.mxu0 0
    %180 = vmatpush.bf16.msra.mxu0 0
    %181 = vmatpush.bf16.msra.mxu0 0
    %182 = vmatpush.bf16.msra.mxu0 %v105
    %183 = vmatpush.bf16.msra.mxu0 %v104
    %184 = vmatmul.bf16.gmra.mxu0 %v174
    %v185 = vpop.f32.mrf.mxu0
    %v186 = vadd.f32 0.0, %v185
    %v187 = vpop.f32.mrf.mxu0
    %188 = vdwg.mxu0
    %v190 = vrot.slane %v186, 6
    %v192 = vadd.f32 %v92, %v190
    %v193 = vxor.u32 %v192, 2147483648
    %v194 = vmul.f32 %v193, 1.442695
    %v195 = vpow.pop %v194
    %v196 = vadd.f32 %v195, 1.0
    %v197 = vrcp.pop %v196
    %v198 = vmul.f32 %v196, %v197
    %v199 = vsub.f32 1.0, %v198
    %v200 = vmul.f32 %v197, %v199
    %v201 = vadd.f32 %v197, %v200
    %vm202 = vweird.f32 %v196
    %vm203 = vweird.f32 %v197
    %vm204 = vmor %vm202, %vm203
    %v205 = vsel %vm204, %v197, %v201
    %v206 = vand.u32 2147483647, %v196
    %vm207 = vcmp.eq.f32.partialorder %v206, 8.507059e+37
    %v208 = vand.u32 %v196, 2147483648
    %v209 = vor.u32 1.1754944e-38, %v208
    %v210 = vsel %vm207, %v209, %v205
    %v211 = vmul.f32 1.0, %v210
    %v212 = vtanh.pop %v192
    %v214 = vrot.slane %v156, 6
    %v216 = vmul.f32 %v211, %v214
    %218 = vrot.lane.b32.xlu0 %v212, 64
    %v219 = vpop.permute.xlu0 %218
    %v221 = vmul.f32 %v211, %v219
    %223 = vrot.lane.b32.xlu0 %v221, 32
    %v224 = vpop.permute.xlu0 %223
    %v226 = vadd.f32 %v216, %v224
    %v227 = vtanh.pop %v226
    %229 = vrot.lane.b32.xlu0 %v227, 64
    %v230 = vpop.permute.xlu0 %229
    %v232 = vmul.f32 %v211, %v230
    %234 = vrot.lane.b32.xlu0 %v232, 32
    %v235 = vpop.permute.xlu0 %234
    %vm237 = vcmask 257026
    %238 = vst.msk [vmem:[#allocation2] sm:$0xc] %vm237, %v235
    %v239 = vpack.c.bf16 %v232, %v232
    %v241 = vrot.slane %v239, 1
    %242 = vrot.lane.b32.xlu0 %v241, 32
    %v243 = vpop.permute.xlu0 %242
    %v245 = vsel %vm108, %v243, 0
    %247 = vmatpush.bf16.msra.mxu0 0
    %248 = vmatpush.bf16.msra.mxu0 0
    %249 = vmatpush.bf16.msra.mxu0 0
    %250 = vmatpush.bf16.msra.mxu0 0
    %251 = vmatpush.bf16.msra.mxu0 0
    %252 = vmatpush.bf16.msra.mxu0 0
    %253 = vmatpush.bf16.msra.mxu0 %v105
    %254 = vmatpush.bf16.msra.mxu0 %v104
    %255 = vmatmul.bf16.gmra.mxu0 %v245
    %v256 = vpop.f32.mrf.mxu0
    %v257 = vadd.f32 0.0, %v256
    %v258 = vpop.f32.mrf.mxu0
    %259 = vdwg.mxu0
    %v261 = vrot.slane %v257, 4
    %v263 = vadd.f32 %v92, %v261
    %v264 = vxor.u32 %v263, 2147483648
    %v265 = vmul.f32 %v264, 1.442695
    %v266 = vpow.pop %v265
    %v267 = vadd.f32 %v266, 1.0
    %v268 = vrcp.pop %v267
    %v269 = vmul.f32 %v267, %v268
    %v270 = vsub.f32 1.0, %v269
    %v271 = vmul.f32 %v268, %v270
    %v272 = vadd.f32 %v268, %v271
    %vm273 = vweird.f32 %v267
    %vm274 = vweird.f32 %v268
    %vm275 = vmor %vm273, %vm274
    %v276 = vsel %vm275, %v268, %v272
    %v277 = vand.u32 2147483647, %v267
    %vm278 = vcmp.eq.f32.partialorder %v277, 8.507059e+37
    %v279 = vand.u32 %v267, 2147483648
    %v280 = vor.u32 1.1754944e-38, %v279
    %v281 = vsel %vm278, %v280, %v276
    %v282 = vmul.f32 1.0, %v281
    %v283 = vtanh.pop %v263
    %v285 = vrot.slane %v226, 6
    %v287 = vmul.f32 %v282, %v285
    %289 = vrot.lane.b32.xlu0 %v283, 64
    %v290 = vpop.permute.xlu0 %289
    %v292 = vmul.f32 %v282, %v290
    %294 = vrot.lane.b32.xlu0 %v292, 32
    %v295 = vpop.permute.xlu0 %294
    %v297 = vadd.f32 %v287, %v295
    %v298 = vtanh.pop %v297
    %300 = vrot.lane.b32.xlu0 %v298, 64
    %v301 = vpop.permute.xlu0 %300
    %v303 = vmul.f32 %v282, %v301
    %305 = vrot.lane.b32.xlu0 %v303, 32
    %v306 = vpop.permute.xlu0 %305
    %vm308 = vcmask 259076
    %309 = vst.msk [vmem:[#allocation2] sm:$0x30] %vm308, %v306
    %v310 = vpack.c.bf16 %v303, %v303
    %v312 = vrot.slane %v310, 2
    %313 = vrot.lane.b32.xlu0 %v312, 32
    %v314 = vpop.permute.xlu0 %313
    %v316 = vsel %vm108, %v314, 0
    %318 = vmatpush.bf16.msra.mxu0 0
    %319 = vmatpush.bf16.msra.mxu0 0
    %320 = vmatpush.bf16.msra.mxu0 0
    %321 = vmatpush.bf16.msra.mxu0 0
    %322 = vmatpush.bf16.msra.mxu0 0
    %323 = vmatpush.bf16.msra.mxu0 0
    %324 = vmatpush.bf16.msra.mxu0 %v105
    %325 = vmatpush.bf16.msra.mxu0 %v104
    %326 = vmatmul.bf16.gmra.mxu0 %v316
    %v327 = vpop.f32.mrf.mxu0
    %v328 = vadd.f32 0.0, %v327
    %v329 = vpop.f32.mrf.mxu0
    %330 = vdwg.mxu0
    %v332 = vrot.slane %v328, 2
    %v334 = vadd.f32 %v92, %v332
    %v335 = vxor.u32 %v334, 2147483648
    %v336 = vmul.f32 %v335, 1.442695
    %v337 = vpow.pop %v336
    %v338 = vadd.f32 %v337, 1.0
    %v339 = vrcp.pop %v338
    %v340 = vmul.f32 %v338, %v339
    %v341 = vsub.f32 1.0, %v340
    %v342 = vmul.f32 %v339, %v341
    %v343 = vadd.f32 %v339, %v342
    %vm344 = vweird.f32 %v338
    %vm345 = vweird.f32 %v339
    %vm346 = vmor %vm344, %vm345
    %v347 = vsel %vm346, %v339, %v343
    %v348 = vand.u32 2147483647, %v338
    %vm349 = vcmp.eq.f32.partialorder %v348, 8.507059e+37
    %v350 = vand.u32 %v338, 2147483648
    %v351 = vor.u32 1.1754944e-38, %v350
    %v352 = vsel %vm349, %v351, %v347
    %v353 = vmul.f32 1.0, %v352
    %v354 = vtanh.pop %v334
    %v356 = vrot.slane %v297, 6
    %v358 = vmul.f32 %v353, %v356
    %360 = vrot.lane.b32.xlu0 %v354, 64
    %v361 = vpop.permute.xlu0 %360
    %v363 = vmul.f32 %v353, %v361
    %365 = vrot.lane.b32.xlu0 %v363, 32
    %v366 = vpop.permute.xlu0 %365
    %v368 = vadd.f32 %v358, %v366
    %v369 = vtanh.pop %v368
    %371 = vrot.lane.b32.xlu0 %v369, 64
    %v372 = vpop.permute.xlu0 %371
    %v374 = vmul.f32 %v353, %v372
    %376 = vrot.lane.b32.xlu0 %v374, 32
    %v377 = vpop.permute.xlu0 %376
    %vm379 = vcmask 261126
    %380 = vst.msk [vmem:[#allocation2] sm:$0xc0] %vm379, %v377
    %v381 = vpack.c.bf16 %v374, %v374
    %v383 = vrot.slane %v381, 3
    %384 = vrot.lane.b32.xlu0 %v383, 32
    %v385 = vpop.permute.xlu0 %384
    %v387 = vsel %vm108, %v385, 0
    %389 = vmatpush.bf16.msra.mxu0 0
    %390 = vmatpush.bf16.msra.mxu0 0
    %391 = vmatpush.bf16.msra.mxu0 0
    %392 = vmatpush.bf16.msra.mxu0 0
    %393 = vmatpush.bf16.msra.mxu0 0
    %394 = vmatpush.bf16.msra.mxu0 0
    %395 = vmatpush.bf16.msra.mxu0 %v105
    %396 = vmatpush.bf16.msra.mxu0 %v104
    %397 = vmatmul.bf16.gmra.mxu0 %v387
    %v398 = vpop.f32.mrf.mxu0
    %v399 = vadd.f32 0.0, %v398
    %v400 = vpop.f32.mrf.mxu0
    %401 = vdwg.mxu0
    %v402 = vadd.f32 %v94, %v399
    %v403 = vxor.u32 %v402, 2147483648
    %v404 = vmul.f32 %v403, 1.442695
    %v405 = vpow.pop %v404
    %v406 = vadd.f32 %v405, 1.0
    %v407 = vrcp.pop %v406
    %v408 = vmul.f32 %v406, %v407
    %v409 = vsub.f32 1.0, %v408
    %v410 = vmul.f32 %v407, %v409
    %v411 = vadd.f32 %v407, %v410
    %vm412 = vweird.f32 %v406
    %vm413 = vweird.f32 %v407
    %vm414 = vmor %vm412, %vm413
    %v415 = vsel %vm414, %v407, %v411
    %v416 = vand.u32 2147483647, %v406
    %vm417 = vcmp.eq.f32.partialorder %v416, 8.507059e+37
    %v418 = vand.u32 %v406, 2147483648
    %v419 = vor.u32 1.1754944e-38, %v418
    %v420 = vsel %vm417, %v419, %v415
    %v421 = vmul.f32 1.0, %v420
    %v422 = vtanh.pop %v402
    %v424 = vrot.slane %v368, 6
    %v426 = vmul.f32 %v421, %v424
    %428 = vrot.lane.b32.xlu0 %v422, 64
    %v429 = vpop.permute.xlu0 %428
    %v431 = vmul.f32 %v421, %v429
    %433 = vrot.lane.b32.xlu0 %v431, 32
    %v434 = vpop.permute.xlu0 %433
    %v436 = vadd.f32 %v426, %v434
    %v437 = vtanh.pop %v436
    %439 = vrot.lane.b32.xlu0 %v437, 64
    %v440 = vpop.permute.xlu0 %439
    %v442 = vmul.f32 %v421, %v440
    %444 = vrot.lane.b32.xlu0 %v442, 32
    %v445 = vpop.permute.xlu0 %444
    %447 = vst.msk [vmem:[#allocation2 + $0x8] sm:$0x3] %vm167, %v445
    %v448 = vpack.c.bf16 %v442, %v442
    %450 = vrot.lane.b32.xlu0 %v448, 32
    %v451 = vpop.permute.xlu0 %450
    %v453 = vsel %vm108, %v451, 0
    %455 = vmatpush.bf16.msra.mxu0 0
    %456 = vmatpush.bf16.msra.mxu0 0
    %457 = vmatpush.bf16.msra.mxu0 0
    %458 = vmatpush.bf16.msra.mxu0 0
    %459 = vmatpush.bf16.msra.mxu0 0
    %460 = vmatpush.bf16.msra.mxu0 0
    %461 = vmatpush.bf16.msra.mxu0 %v105
    %462 = vmatpush.bf16.msra.mxu0 %v104
    %463 = vmatmul.bf16.gmra.mxu0 %v453
    %v464 = vpop.f32.mrf.mxu0
    %v465 = vadd.f32 0.0, %v464
    %v466 = vpop.f32.mrf.mxu0
    %467 = vdwg.mxu0
    %v469 = vrot.slane %v465, 6
    %v471 = vadd.f32 %v94, %v469
    %v472 = vxor.u32 %v471, 2147483648
    %v473 = vmul.f32 %v472, 1.442695
    %v474 = vpow.pop %v473
    %v475 = vadd.f32 %v474, 1.0
    %v476 = vrcp.pop %v475
    %v477 = vmul.f32 %v475, %v476
    %v478 = vsub.f32 1.0, %v477
    %v479 = vmul.f32 %v476, %v478
    %v480 = vadd.f32 %v476, %v479
    %vm481 = vweird.f32 %v475
    %vm482 = vweird.f32 %v476
    %vm483 = vmor %vm481, %vm482
    %v484 = vsel %vm483, %v476, %v480
    %v485 = vand.u32 2147483647, %v475
    %vm486 = vcmp.eq.f32.partialorder %v485, 8.507059e+37
    %v487 = vand.u32 %v475, 2147483648
    %v488 = vor.u32 1.1754944e-38, %v487
    %v489 = vsel %vm486, %v488, %v484
    %v490 = vmul.f32 1.0, %v489
    %v491 = vtanh.pop %v471
    %v493 = vrot.slane %v436, 6
    %v495 = vmul.f32 %v490, %v493
    %497 = vrot.lane.b32.xlu0 %v491, 64
    %v498 = vpop.permute.xlu0 %497
    %v500 = vmul.f32 %v490, %v498
    %502 = vrot.lane.b32.xlu0 %v500, 32
    %v503 = vpop.permute.xlu0 %502
    %v505 = vadd.f32 %v495, %v503
    %v506 = vtanh.pop %v505
    %508 = vrot.lane.b32.xlu0 %v506, 64
    %v509 = vpop.permute.xlu0 %508
    %v511 = vmul.f32 %v490, %v509
    %513 = vrot.lane.b32.xlu0 %v511, 32
    %v514 = vpop.permute.xlu0 %513
    %516 = vst.msk [vmem:[#allocation2 + $0x8] sm:$0xc] %vm237, %v514
    %v517 = vpack.c.bf16 %v511, %v511
    %v519 = vrot.slane %v517, 1
    %520 = vrot.lane.b32.xlu0 %v519, 32
    %v521 = vpop.permute.xlu0 %520
    %v523 = vsel %vm108, %v521, 0
    %525 = vmatpush.bf16.msra.mxu0 0
    %526 = vmatpush.bf16.msra.mxu0 0
    %527 = vmatpush.bf16.msra.mxu0 0
    %528 = vmatpush.bf16.msra.mxu0 0
    %529 = vmatpush.bf16.msra.mxu0 0
    %530 = vmatpush.bf16.msra.mxu0 0
    %531 = vmatpush.bf16.msra.mxu0 %v105
    %532 = vmatpush.bf16.msra.mxu0 %v104
    %533 = vmatmul.bf16.gmra.mxu0 %v523
    %v534 = vpop.f32.mrf.mxu0
    %v535 = vadd.f32 0.0, %v534
    %v536 = vpop.f32.mrf.mxu0
    %537 = vdwg.mxu0
    %v539 = vrot.slane %v535, 4
    %v541 = vadd.f32 %v94, %v539
    %v542 = vxor.u32 %v541, 2147483648
    %v543 = vmul.f32 %v542, 1.442695
    %v544 = vpow.pop %v543
    %v545 = vadd.f32 %v544, 1.0
    %v546 = vrcp.pop %v545
    %v547 = vmul.f32 %v545, %v546
    %v548 = vsub.f32 1.0, %v547
    %v549 = vmul.f32 %v546, %v548
    %v550 = vadd.f32 %v546, %v549
    %vm551 = vweird.f32 %v545
    %vm552 = vweird.f32 %v546
    %vm553 = vmor %vm551, %vm552
    %v554 = vsel %vm553, %v546, %v550
    %v555 = vand.u32 2147483647, %v545
    %vm556 = vcmp.eq.f32.partialorder %v555, 8.507059e+37
    %v557 = vand.u32 %v545, 2147483648
    %v558 = vor.u32 1.1754944e-38, %v557
    %v559 = vsel %vm556, %v558, %v554
    %v560 = vmul.f32 1.0, %v559
    %v561 = vtanh.pop %v541
    %v563 = vrot.slane %v505, 6
    %v565 = vmul.f32 %v560, %v563
    %567 = vrot.lane.b32.xlu0 %v561, 64
    %v568 = vpop.permute.xlu0 %567
    %v570 = vmul.f32 %v560, %v568
    %572 = vrot.lane.b32.xlu0 %v570, 32
    %v573 = vpop.permute.xlu0 %572
    %v575 = vadd.f32 %v565, %v573
    %v576 = vtanh.pop %v575
    %578 = vrot.lane.b32.xlu0 %v576, 64
    %v579 = vpop.permute.xlu0 %578
    %v581 = vmul.f32 %v560, %v579
    %583 = vrot.lane.b32.xlu0 %v581, 32
    %v584 = vpop.permute.xlu0 %583
    %586 = vst.msk [vmem:[#allocation2 + $0x8] sm:$0x30] %vm308, %v584
    %v587 = vpack.c.bf16 %v581, %v581
    %v589 = vrot.slane %v587, 2
    %590 = vrot.lane.b32.xlu0 %v589, 32
    %v591 = vpop.permute.xlu0 %590
    %v593 = vsel %vm108, %v591, 0
    %595 = vmatpush.bf16.msra.mxu0 0
    %596 = vmatpush.bf16.msra.mxu0 0
    %597 = vmatpush.bf16.msra.mxu0 0
    %598 = vmatpush.bf16.msra.mxu0 0
    %599 = vmatpush.bf16.msra.mxu0 0
    %600 = vmatpush.bf16.msra.mxu0 0
    %601 = vmatpush.bf16.msra.mxu0 %v105
    %602 = vmatpush.bf16.msra.mxu0 %v104
    %603 = vmatmul.bf16.gmra.mxu0 %v593
    %v604 = vpop.f32.mrf.mxu0
    %v605 = vadd.f32 0.0, %v604
    %v606 = vpop.f32.mrf.mxu0
    %607 = vdwg.mxu0
    %v609 = vrot.slane %v605, 2
    %v611 = vadd.f32 %v94, %v609
    %v612 = vxor.u32 %v611, 2147483648
    %v613 = vmul.f32 %v612, 1.442695
    %v614 = vpow.pop %v613
    %v615 = vadd.f32 %v614, 1.0
    %v616 = vrcp.pop %v615
    %v617 = vmul.f32 %v615, %v616
    %v618 = vsub.f32 1.0, %v617
    %v619 = vmul.f32 %v616, %v618
    %v620 = vadd.f32 %v616, %v619
    %vm621 = vweird.f32 %v615
    %vm622 = vweird.f32 %v616
    %vm623 = vmor %vm621, %vm622
    %v624 = vsel %vm623, %v616, %v620
    %v625 = vand.u32 2147483647, %v615
    %vm626 = vcmp.eq.f32.partialorder %v625, 8.507059e+37
    %v627 = vand.u32 %v615, 2147483648
    %v628 = vor.u32 1.1754944e-38, %v627
    %v629 = vsel %vm626, %v628, %v624
    %v630 = vmul.f32 1.0, %v629
    %v631 = vtanh.pop %v611
    %v633 = vrot.slane %v575, 6
    %v635 = vmul.f32 %v630, %v633
    %637 = vrot.lane.b32.xlu0 %v631, 64
    %v638 = vpop.permute.xlu0 %637
    %v640 = vmul.f32 %v630, %v638
    %642 = vrot.lane.b32.xlu0 %v640, 32
    %v643 = vpop.permute.xlu0 %642
    %v645 = vadd.f32 %v635, %v643
    %v646 = vtanh.pop %v645
    %648 = vrot.lane.b32.xlu0 %v646, 64
    %v649 = vpop.permute.xlu0 %648
    %v651 = vmul.f32 %v630, %v649
    %653 = vrot.lane.b32.xlu0 %v651, 32
    %v654 = vpop.permute.xlu0 %653
    %656 = vst.msk [vmem:[#allocation2 + $0x8] sm:$0xc0] %vm379, %v654
    %v657 = vld [vmem:[#allocation6 + $0x18] sm:$0xf]
    %v658 = vld [vmem:[#allocation6 + $0x1c] sm:$0xf]
    %v659 = vld [vmem:[#allocation6 + $0x20] sm:$0xf]
    %v660 = vld [vmem:[#allocation6 + $0x24] sm:$0xf]
    %v661 = vld [vmem:[#allocation6 + $0x28] sm:$0xf]
    %v662 = vld [vmem:[#allocation6 + $0x2c] sm:$0xf]
    %v663 = vld [vmem:[#allocation6 + $0x30] sm:$0xf]
    %v664 = vld [vmem:[#allocation6 + $0x34] sm:$0xf]
    %v665 = vld [vmem:[#allocation8 + $0x1] sm:$0x1]
    %v666 = vld [vmem:[#allocation2] sm:$0xff]
    %v667 = vld [vmem:[#allocation2 + $0x8] sm:$0xff]
    %v668 = vpack.c.bf16 %v667, %v666
    %v669 = vperm.slane %v665, 0
    %v674 = vunpack.c.l.b16 %v657
    %v675 = vunpack.c.l.b16 %v658
    %v676 = vunpack.c.l.b16 %v659
    %v677 = vunpack.c.l.b16 %v660
    %v678 = vpack.c.b16 %v675, %v674
    %v679 = vpack.c.b16 %v677, %v676
    %v683 = vsel %vm108, %v668, 0
    %685 = vmatpush.bf16.msra.mxu0 0
    %686 = vmatpush.bf16.msra.mxu0 0
    %687 = vmatpush.bf16.msra.mxu0 0
    %688 = vmatpush.bf16.msra.mxu0 0
    %689 = vmatpush.bf16.msra.mxu0 0
    %690 = vmatpush.bf16.msra.mxu0 0
    %691 = vmatpush.bf16.msra.mxu0 %v679
    %692 = vmatpush.bf16.msra.mxu0 %v678
    %693 = vmatmul.bf16.gmra.mxu0 %v683
    %v694 = vpop.f32.mrf.mxu0
    %v695 = vadd.f32 %v669, %v694
    %v696 = vpop.f32.mrf.mxu0
    %v697 = vadd.f32 %v669, %v696
    %698 = vdwg.mxu0
    %v703 = vunpack.c.l.b16 %v661
    %v704 = vunpack.c.l.b16 %v662
    %v705 = vunpack.c.l.b16 %v663
    %v706 = vunpack.c.l.b16 %v664
    %v707 = vpack.c.b16 %v704, %v703
    %v708 = vpack.c.b16 %v706, %v705
    %711 = vmatpush.bf16.msra.mxu0 0
    %712 = vmatpush.bf16.msra.mxu0 0
    %713 = vmatpush.bf16.msra.mxu0 0
    %714 = vmatpush.bf16.msra.mxu0 0
    %715 = vmatpush.bf16.msra.mxu0 0
    %716 = vmatpush.bf16.msra.mxu0 0
    %717 = vmatpush.bf16.msra.mxu0 %v708
    %718 = vmatpush.bf16.msra.mxu0 %v707
    %719 = vmatmul.bf16.gmra.mxu0 %v110
    %v720 = vpop.f32.mrf.mxu0
    %v721 = vadd.f32 0.0, %v720
    %v722 = vpop.f32.mrf.mxu0
    %723 = vdwg.mxu0
    %v724 = vadd.f32 %v695, %v721
    %v725 = vxor.u32 %v724, 2147483648
    %v726 = vmul.f32 %v725, 1.442695
    %v727 = vpow.pop %v726
    %v728 = vadd.f32 %v727, 1.0
    %v729 = vrcp.pop %v728
    %v730 = vmul.f32 %v728, %v729
    %v731 = vsub.f32 1.0, %v730
    %v732 = vmul.f32 %v729, %v731
    %v733 = vadd.f32 %v729, %v732
    %vm734 = vweird.f32 %v728
    %vm735 = vweird.f32 %v729
    %vm736 = vmor %vm734, %vm735
    %v737 = vsel %vm736, %v729, %v733
    %v738 = vand.u32 2147483647, %v728
    %vm739 = vcmp.eq.f32.partialorder %v738, 8.507059e+37
    %v740 = vand.u32 %v728, 2147483648
    %v741 = vor.u32 1.1754944e-38, %v740
    %v742 = vsel %vm739, %v741, %v737
    %v743 = vmul.f32 1.0, %v742
    %v744 = vtanh.pop %v724
    %v745 = vmul.f32 %v743, 0.0
    %747 = vrot.lane.b32.xlu0 %v744, 64
    %v748 = vpop.permute.xlu0 %747
    %v750 = vmul.f32 %v743, %v748
    %752 = vrot.lane.b32.xlu0 %v750, 32
    %v753 = vpop.permute.xlu0 %752
    %v755 = vadd.f32 %v745, %v753
    %v756 = vtanh.pop %v755
    %758 = vrot.lane.b32.xlu0 %v756, 64
    %v759 = vpop.permute.xlu0 %758
    %v761 = vmul.f32 %v743, %v759
    %v762 = vld [vmem:[#allocation6 + $0x38] sm:$0xf]
    %v763 = vld [vmem:[#allocation6 + $0x3c] sm:$0xf]
    %v764 = vld [vmem:[#allocation6 + $0x40] sm:$0xf]
    %v765 = vld [vmem:[#allocation6 + $0x44] sm:$0xf]
    %v766 = vtanh.pop %v761
    %v767 = vpack.c.bf16 %v766, %v766
    %v768 = vpack.c.bf16 %v761, %v761
    %770 = vrot.lane.b32.xlu0 %v768, 32
    %v771 = vpop.permute.xlu0 %770
    %v773 = vsel %vm108, %v771, 0
    %775 = vmatpush.bf16.msra.mxu0 0
    %776 = vmatpush.bf16.msra.mxu0 0
    %777 = vmatpush.bf16.msra.mxu0 0
    %778 = vmatpush.bf16.msra.mxu0 0
    %779 = vmatpush.bf16.msra.mxu0 0
    %780 = vmatpush.bf16.msra.mxu0 0
    %781 = vmatpush.bf16.msra.mxu0 %v708
    %782 = vmatpush.bf16.msra.mxu0 %v707
    %783 = vmatmul.bf16.gmra.mxu0 %v773
    %v784 = vpop.f32.mrf.mxu0
    %v785 = vadd.f32 0.0, %v784
    %v786 = vpop.f32.mrf.mxu0
    %787 = vdwg.mxu0
    %v789 = vrot.slane %v785, 6
    %v791 = vadd.f32 %v695, %v789
    %v792 = vxor.u32 %v791, 2147483648
    %v793 = vmul.f32 %v792, 1.442695
    %v794 = vpow.pop %v793
    %v795 = vadd.f32 %v794, 1.0
    %v796 = vrcp.pop %v795
    %v797 = vmul.f32 %v795, %v796
    %v798 = vsub.f32 1.0, %v797
    %v799 = vmul.f32 %v796, %v798
    %v800 = vadd.f32 %v796, %v799
    %vm801 = vweird.f32 %v795
    %vm802 = vweird.f32 %v796
    %vm803 = vmor %vm801, %vm802
    %v804 = vsel %vm803, %v796, %v800
    %v805 = vand.u32 2147483647, %v795
    %vm806 = vcmp.eq.f32.partialorder %v805, 8.507059e+37
    %v807 = vand.u32 %v795, 2147483648
    %v808 = vor.u32 1.1754944e-38, %v807
    %v809 = vsel %vm806, %v808, %v804
    %v810 = vmul.f32 1.0, %v809
    %v811 = vtanh.pop %v791
    %v813 = vrot.slane %v755, 6
    %v815 = vmul.f32 %v810, %v813
    %817 = vrot.lane.b32.xlu0 %v811, 64
    %v818 = vpop.permute.xlu0 %817
    %v820 = vmul.f32 %v810, %v818
    %822 = vrot.lane.b32.xlu0 %v820, 32
    %v823 = vpop.permute.xlu0 %822
    %v825 = vadd.f32 %v815, %v823
    %v826 = vtanh.pop %v825
    %828 = vrot.lane.b32.xlu0 %v826, 64
    %v829 = vpop.permute.xlu0 %828
    %v831 = vmul.f32 %v810, %v829
    %v832 = vld [vmem:[#allocation6 + $0x48] sm:$0xf]
    %v833 = vld [vmem:[#allocation6 + $0x4c] sm:$0xf]
    %v834 = vld [vmem:[#allocation6 + $0x50] sm:$0xf]
    %v835 = vld [vmem:[#allocation6 + $0x54] sm:$0xf]
    %v836 = vtanh.pop %v831
    %v837 = vpack.c.bf16 %v836, %v836
    %v839 = vrot.slane %v837, 1
    %840 = vrot.lane.b32.xlu0 %v839, 32
    %v841 = vpop.permute.xlu0 %840
    %v846 = vunpack.c.l.b16 %v832
    %v847 = vunpack.c.l.b16 %v833
    %v848 = vunpack.c.l.b16 %v834
    %v849 = vunpack.c.l.b16 %v835
    %v850 = vpack.c.b16 %v847, %v846
    %v851 = vpack.c.b16 %v849, %v848
    %v855 = vsel %vm108, %v841, 0
    %857 = vmatpush.bf16.msra.mxu0 0
    %858 = vmatpush.bf16.msra.mxu0 0
    %859 = vmatpush.bf16.msra.mxu0 0
    %860 = vmatpush.bf16.msra.mxu0 0
    %861 = vmatpush.bf16.msra.mxu0 0
    %862 = vmatpush.bf16.msra.mxu0 0
    %863 = vmatpush.bf16.msra.mxu0 %v851
    %864 = vmatpush.bf16.msra.mxu0 %v850
    %865 = vmatmul.bf16.gmra.mxu0 %v855
    %v866 = vpop.f32.mrf.mxu0
    %v867 = vadd.f32 0.0, %v866
    %v868 = vpop.f32.mrf.mxu0
    %869 = vdwg.mxu0
    %871 = vrot.lane.b32.xlu0 %v767, 32
    %v872 = vpop.permute.xlu0 %871
    %v877 = vunpack.c.l.b16 %v762
    %v878 = vunpack.c.l.b16 %v763
    %v879 = vunpack.c.l.b16 %v764
    %v880 = vunpack.c.l.b16 %v765
    %v881 = vpack.c.b16 %v878, %v877
    %v882 = vpack.c.b16 %v880, %v879
    %v886 = vsel %vm108, %v872, 0
    %888 = vmatpush.bf16.msra.mxu0 0
    %889 = vmatpush.bf16.msra.mxu0 0
    %890 = vmatpush.bf16.msra.mxu0 0
    %891 = vmatpush.bf16.msra.mxu0 0
    %892 = vmatpush.bf16.msra.mxu0 0
    %893 = vmatpush.bf16.msra.mxu0 0
    %894 = vmatpush.bf16.msra.mxu0 %v882
    %895 = vmatpush.bf16.msra.mxu0 %v881
    %896 = vmatmul.bf16.gmra.mxu0 %v886
    %v897 = vpop.f32.mrf.mxu0
    %v898 = vadd.f32 %v867, %v897
    %v899 = vpop.f32.mrf.mxu0
    %900 = vdwg.mxu0
    %v901 = vpack.c.bf16 %v831, %v831
    %v903 = vrot.slane %v901, 1
    %904 = vrot.lane.b32.xlu0 %v903, 32
    %v905 = vpop.permute.xlu0 %904
    %v907 = vsel %vm108, %v905, 0
    %909 = vmatpush.bf16.msra.mxu0 0
    %910 = vmatpush.bf16.msra.mxu0 0
    %911 = vmatpush.bf16.msra.mxu0 0
    %912 = vmatpush.bf16.msra.mxu0 0
    %913 = vmatpush.bf16.msra.mxu0 0
    %914 = vmatpush.bf16.msra.mxu0 0
    %915 = vmatpush.bf16.msra.mxu0 %v708
    %916 = vmatpush.bf16.msra.mxu0 %v707
    %917 = vmatmul.bf16.gmra.mxu0 %v907
    %v918 = vpop.f32.mrf.mxu0
    %v919 = vadd.f32 0.0, %v918
    %v920 = vpop.f32.mrf.mxu0
    %921 = vdwg.mxu0
    %v923 = vrot.slane %v919, 4
    %v925 = vadd.f32 %v695, %v923
    %v926 = vxor.u32 %v925, 2147483648
    %v927 = vmul.f32 %v926, 1.442695
    %v928 = vpow.pop %v927
    %v929 = vadd.f32 %v928, 1.0
    %v930 = vrcp.pop %v929
    %v931 = vmul.f32 %v929, %v930
    %v932 = vsub.f32 1.0, %v931
    %v933 = vmul.f32 %v930, %v932
    %v934 = vadd.f32 %v930, %v933
    %vm935 = vweird.f32 %v929
    %vm936 = vweird.f32 %v930
    %vm937 = vmor %vm935, %vm936
    %v938 = vsel %vm937, %v930, %v934
    %v939 = vand.u32 2147483647, %v929
    %vm940 = vcmp.eq.f32.partialorder %v939, 8.507059e+37
    %v941 = vand.u32 %v929, 2147483648
    %v942 = vor.u32 1.1754944e-38, %v941
    %v943 = vsel %vm940, %v942, %v938
    %v944 = vmul.f32 1.0, %v943
    %v945 = vtanh.pop %v925
    %v947 = vrot.slane %v825, 6
    %v949 = vmul.f32 %v944, %v947
    %951 = vrot.lane.b32.xlu0 %v945, 64
    %v952 = vpop.permute.xlu0 %951
    %v954 = vmul.f32 %v944, %v952
    %956 = vrot.lane.b32.xlu0 %v954, 32
    %v957 = vpop.permute.xlu0 %956
    %v959 = vadd.f32 %v949, %v957
    %v960 = vtanh.pop %v959
    %962 = vrot.lane.b32.xlu0 %v960, 64
    %v963 = vpop.permute.xlu0 %962
    %v965 = vmul.f32 %v944, %v963
    %v966 = vld [vmem:[#allocation6 + $0x58] sm:$0xf]
    %v967 = vld [vmem:[#allocation6 + $0x5c] sm:$0xf]
    %v968 = vld [vmem:[#allocation6 + $0x60] sm:$0xf]
    %v969 = vld [vmem:[#allocation6 + $0x64] sm:$0xf]
    %v970 = vtanh.pop %v965
    %v971 = vpack.c.bf16 %v970, %v970
    %v973 = vrot.slane %v971, 2
    %974 = vrot.lane.b32.xlu0 %v973, 32
    %v975 = vpop.permute.xlu0 %974
    %v980 = vunpack.c.l.b16 %v966
    %v981 = vunpack.c.l.b16 %v967
    %v982 = vunpack.c.l.b16 %v968
    %v983 = vunpack.c.l.b16 %v969
    %v984 = vpack.c.b16 %v981, %v980
    %v985 = vpack.c.b16 %v983, %v982
    %v989 = vsel %vm108, %v975, 0
    %991 = vmatpush.bf16.msra.mxu0 0
    %992 = vmatpush.bf16.msra.mxu0 0
    %993 = vmatpush.bf16.msra.mxu0 0
    %994 = vmatpush.bf16.msra.mxu0 0
    %995 = vmatpush.bf16.msra.mxu0 0
    %996 = vmatpush.bf16.msra.mxu0 0
    %997 = vmatpush.bf16.msra.mxu0 %v985
    %998 = vmatpush.bf16.msra.mxu0 %v984
    %999 = vmatmul.bf16.gmra.mxu0 %v989
    %v1000 = vpop.f32.mrf.mxu0
    %v1001 = vadd.f32 0.0, %v1000
    %v1002 = vpop.f32.mrf.mxu0
    %1003 = vdwg.mxu0
    %v1004 = vadd.f32 %v898, %v1001
    %v1005 = vpack.c.bf16 %v965, %v965
    %v1007 = vrot.slane %v1005, 2
    %1008 = vrot.lane.b32.xlu0 %v1007, 32
    %v1009 = vpop.permute.xlu0 %1008
    %v1011 = vsel %vm108, %v1009, 0
    %1013 = vmatpush.bf16.msra.mxu0 0
    %1014 = vmatpush.bf16.msra.mxu0 0
    %1015 = vmatpush.bf16.msra.mxu0 0
    %1016 = vmatpush.bf16.msra.mxu0 0
    %1017 = vmatpush.bf16.msra.mxu0 0
    %1018 = vmatpush.bf16.msra.mxu0 0
    %1019 = vmatpush.bf16.msra.mxu0 %v708
    %1020 = vmatpush.bf16.msra.mxu0 %v707
    %1021 = vmatmul.bf16.gmra.mxu0 %v1011
    %v1022 = vpop.f32.mrf.mxu0
    %v1023 = vadd.f32 0.0, %v1022
    %v1024 = vpop.f32.mrf.mxu0
    %1025 = vdwg.mxu0
    %v1027 = vrot.slane %v1023, 2
    %v1029 = vadd.f32 %v695, %v1027
    %v1030 = vxor.u32 %v1029, 2147483648
    %v1031 = vmul.f32 %v1030, 1.442695
    %v1032 = vpow.pop %v1031
    %v1033 = vadd.f32 %v1032, 1.0
    %v1034 = vrcp.pop %v1033
    %v1035 = vmul.f32 %v1033, %v1034
    %v1036 = vsub.f32 1.0, %v1035
    %v1037 = vmul.f32 %v1034, %v1036
    %v1038 = vadd.f32 %v1034, %v1037
    %vm1039 = vweird.f32 %v1033
    %vm1040 = vweird.f32 %v1034
    %vm1041 = vmor %vm1039, %vm1040
    %v1042 = vsel %vm1041, %v1034, %v1038
    %v1043 = vand.u32 2147483647, %v1033
    %vm1044 = vcmp.eq.f32.partialorder %v1043, 8.507059e+37
    %v1045 = vand.u32 %v1033, 2147483648
    %v1046 = vor.u32 1.1754944e-38, %v1045
    %v1047 = vsel %vm1044, %v1046, %v1042
    %v1048 = vmul.f32 1.0, %v1047
    %v1049 = vtanh.pop %v1029
    %v1051 = vrot.slane %v959, 6
    %v1053 = vmul.f32 %v1048, %v1051
    %1055 = vrot.lane.b32.xlu0 %v1049, 64
    %v1056 = vpop.permute.xlu0 %1055
    %v1058 = vmul.f32 %v1048, %v1056
    %1060 = vrot.lane.b32.xlu0 %v1058, 32
    %v1061 = vpop.permute.xlu0 %1060
    %v1063 = vadd.f32 %v1053, %v1061
    %v1064 = vtanh.pop %v1063
    %1066 = vrot.lane.b32.xlu0 %v1064, 64
    %v1067 = vpop.permute.xlu0 %1066
    %v1069 = vmul.f32 %v1048, %v1067
    %v1070 = vld [vmem:[#allocation6 + $0x68] sm:$0xf]
    %v1071 = vld [vmem:[#allocation6 + $0x6c] sm:$0xf]
    %v1072 = vld [vmem:[#allocation6 + $0x70] sm:$0xf]
    %v1073 = vld [vmem:[#allocation6 + $0x74] sm:$0xf]
    %v1074 = vtanh.pop %v1069
    %v1075 = vpack.c.bf16 %v1074, %v1074
    %v1077 = vrot.slane %v1075, 3
    %1078 = vrot.lane.b32.xlu0 %v1077, 32
    %v1079 = vpop.permute.xlu0 %1078
    %v1084 = vunpack.c.l.b16 %v1070
    %v1085 = vunpack.c.l.b16 %v1071
    %v1086 = vunpack.c.l.b16 %v1072
    %v1087 = vunpack.c.l.b16 %v1073
    %v1088 = vpack.c.b16 %v1085, %v1084
    %v1089 = vpack.c.b16 %v1087, %v1086
    %v1093 = vsel %vm108, %v1079, 0
    %1095 = vmatpush.bf16.msra.mxu0 0
    %1096 = vmatpush.bf16.msra.mxu0 0
    %1097 = vmatpush.bf16.msra.mxu0 0
    %1098 = vmatpush.bf16.msra.mxu0 0
    %1099 = vmatpush.bf16.msra.mxu0 0
    %1100 = vmatpush.bf16.msra.mxu0 0
    %1101 = vmatpush.bf16.msra.mxu0 %v1089
    %1102 = vmatpush.bf16.msra.mxu0 %v1088
    %1103 = vmatmul.bf16.gmra.mxu0 %v1093
    %v1104 = vpop.f32.mrf.mxu0
    %v1105 = vadd.f32 0.0, %v1104
    %v1106 = vpop.f32.mrf.mxu0
    %1107 = vdwg.mxu0
    %v1108 = vadd.f32 %v1004, %v1105
    %v1109 = vpack.c.bf16 %v1069, %v1069
    %v1111 = vrot.slane %v1109, 3
    %1112 = vrot.lane.b32.xlu0 %v1111, 32
    %v1113 = vpop.permute.xlu0 %1112
    %v1115 = vsel %vm108, %v1113, 0
    %1117 = vmatpush.bf16.msra.mxu0 0
    %1118 = vmatpush.bf16.msra.mxu0 0
    %1119 = vmatpush.bf16.msra.mxu0 0
    %1120 = vmatpush.bf16.msra.mxu0 0
    %1121 = vmatpush.bf16.msra.mxu0 0
    %1122 = vmatpush.bf16.msra.mxu0 0
    %1123 = vmatpush.bf16.msra.mxu0 %v708
    %1124 = vmatpush.bf16.msra.mxu0 %v707
    %1125 = vmatmul.bf16.gmra.mxu0 %v1115
    %v1126 = vpop.f32.mrf.mxu0
    %v1127 = vadd.f32 0.0, %v1126
    %v1128 = vpop.f32.mrf.mxu0
    %1129 = vdwg.mxu0
    %v1130 = vadd.f32 %v697, %v1127
    %v1131 = vxor.u32 %v1130, 2147483648
    %v1132 = vmul.f32 %v1131, 1.442695
    %v1133 = vpow.pop %v1132
    %v1134 = vadd.f32 %v1133, 1.0
    %v1135 = vrcp.pop %v1134
    %v1136 = vmul.f32 %v1134, %v1135
    %v1137 = vsub.f32 1.0, %v1136
    %v1138 = vmul.f32 %v1135, %v1137
    %v1139 = vadd.f32 %v1135, %v1138
    %vm1140 = vweird.f32 %v1134
    %vm1141 = vweird.f32 %v1135
    %vm1142 = vmor %vm1140, %vm1141
    %v1143 = vsel %vm1142, %v1135, %v1139
    %v1144 = vand.u32 2147483647, %v1134
    %vm1145 = vcmp.eq.f32.partialorder %v1144, 8.507059e+37
    %v1146 = vand.u32 %v1134, 2147483648
    %v1147 = vor.u32 1.1754944e-38, %v1146
    %v1148 = vsel %vm1145, %v1147, %v1143
    %v1149 = vmul.f32 1.0, %v1148
    %v1150 = vtanh.pop %v1130
    %v1152 = vrot.slane %v1063, 6
    %v1154 = vmul.f32 %v1149, %v1152
    %1156 = vrot.lane.b32.xlu0 %v1150, 64
    %v1157 = vpop.permute.xlu0 %1156
    %v1159 = vmul.f32 %v1149, %v1157
    %1161 = vrot.lane.b32.xlu0 %v1159, 32
    %v1162 = vpop.permute.xlu0 %1161
    %v1164 = vadd.f32 %v1154, %v1162
    %v1165 = vtanh.pop %v1164
    %1167 = vrot.lane.b32.xlu0 %v1165, 64
    %v1168 = vpop.permute.xlu0 %1167
    %v1170 = vmul.f32 %v1149, %v1168
    %v1171 = vld [vmem:[#allocation6 + $0x78] sm:$0xf]
    %v1172 = vld [vmem:[#allocation6 + $0x7c] sm:$0xf]
    %v1173 = vld [vmem:[#allocation6 + $0x80] sm:$0xf]
    %v1174 = vld [vmem:[#allocation6 + $0x84] sm:$0xf]
    %v1175 = vtanh.pop %v1170
    %v1176 = vpack.c.bf16 %v1175, %v1175
    %1178 = vrot.lane.b32.xlu0 %v1176, 32
    %v1179 = vpop.permute.xlu0 %1178
    %v1184 = vunpack.c.l.b16 %v1171
    %v1185 = vunpack.c.l.b16 %v1172
    %v1186 = vunpack.c.l.b16 %v1173
    %v1187 = vunpack.c.l.b16 %v1174
    %v1188 = vpack.c.b16 %v1185, %v1184
    %v1189 = vpack.c.b16 %v1187, %v1186
    %v1193 = vsel %vm108, %v1179, 0
    %1195 = vmatpush.bf16.msra.mxu0 0
    %1196 = vmatpush.bf16.msra.mxu0 0
    %1197 = vmatpush.bf16.msra.mxu0 0
    %1198 = vmatpush.bf16.msra.mxu0 0
    %1199 = vmatpush.bf16.msra.mxu0 0
    %1200 = vmatpush.bf16.msra.mxu0 0
    %1201 = vmatpush.bf16.msra.mxu0 %v1189
    %1202 = vmatpush.bf16.msra.mxu0 %v1188
    %1203 = vmatmul.bf16.gmra.mxu0 %v1193
    %v1204 = vpop.f32.mrf.mxu0
    %v1205 = vadd.f32 0.0, %v1204
    %v1206 = vpop.f32.mrf.mxu0
    %1207 = vdwg.mxu0
    %v1208 = vadd.f32 %v1108, %v1205
    %v1209 = vpack.c.bf16 %v1170, %v1170
    %1211 = vrot.lane.b32.xlu0 %v1209, 32
    %v1212 = vpop.permute.xlu0 %1211
    %v1214 = vsel %vm108, %v1212, 0
    %1216 = vmatpush.bf16.msra.mxu0 0
    %1217 = vmatpush.bf16.msra.mxu0 0
    %1218 = vmatpush.bf16.msra.mxu0 0
    %1219 = vmatpush.bf16.msra.mxu0 0
    %1220 = vmatpush.bf16.msra.mxu0 0
    %1221 = vmatpush.bf16.msra.mxu0 0
    %1222 = vmatpush.bf16.msra.mxu0 %v708
    %1223 = vmatpush.bf16.msra.mxu0 %v707
    %1224 = vmatmul.bf16.gmra.mxu0 %v1214
    %v1225 = vpop.f32.mrf.mxu0
    %v1226 = vadd.f32 0.0, %v1225
    %v1227 = vpop.f32.mrf.mxu0
    %1228 = vdwg.mxu0
    %v1230 = vrot.slane %v1226, 6
    %v1232 = vadd.f32 %v697, %v1230
    %v1233 = vxor.u32 %v1232, 2147483648
    %v1234 = vmul.f32 %v1233, 1.442695
    %v1235 = vpow.pop %v1234
    %v1236 = vadd.f32 %v1235, 1.0
    %v1237 = vrcp.pop %v1236
    %v1238 = vmul.f32 %v1236, %v1237
    %v1239 = vsub.f32 1.0, %v1238
    %v1240 = vmul.f32 %v1237, %v1239
    %v1241 = vadd.f32 %v1237, %v1240
    %vm1242 = vweird.f32 %v1236
    %vm1243 = vweird.f32 %v1237
    %vm1244 = vmor %vm1242, %vm1243
    %v1245 = vsel %vm1244, %v1237, %v1241
    %v1246 = vand.u32 2147483647, %v1236
    %vm1247 = vcmp.eq.f32.partialorder %v1246, 8.507059e+37
    %v1248 = vand.u32 %v1236, 2147483648
    %v1249 = vor.u32 1.1754944e-38, %v1248
    %v1250 = vsel %vm1247, %v1249, %v1245
    %v1251 = vmul.f32 1.0, %v1250
    %v1252 = vtanh.pop %v1232
    %v1254 = vrot.slane %v1164, 6
    %v1256 = vmul.f32 %v1251, %v1254
    %1258 = vrot.lane.b32.xlu0 %v1252, 64
    %v1259 = vpop.permute.xlu0 %1258
    %v1261 = vmul.f32 %v1251, %v1259
    %1263 = vrot.lane.b32.xlu0 %v1261, 32
    %v1264 = vpop.permute.xlu0 %1263
    %v1266 = vadd.f32 %v1256, %v1264
    %v1267 = vtanh.pop %v1266
    %1269 = vrot.lane.b32.xlu0 %v1267, 64
    %v1270 = vpop.permute.xlu0 %1269
    %v1272 = vmul.f32 %v1251, %v1270
    %v1273 = vld [vmem:[#allocation6 + $0x88] sm:$0xf]
    %v1274 = vld [vmem:[#allocation6 + $0x8c] sm:$0xf]
    %v1275 = vld [vmem:[#allocation6 + $0x90] sm:$0xf]
    %v1276 = vld [vmem:[#allocation6 + $0x94] sm:$0xf]
    %v1277 = vtanh.pop %v1272
    %v1278 = vpack.c.bf16 %v1277, %v1277
    %v1280 = vrot.slane %v1278, 1
    %1281 = vrot.lane.b32.xlu0 %v1280, 32
    %v1282 = vpop.permute.xlu0 %1281
    %v1287 = vunpack.c.l.b16 %v1273
    %v1288 = vunpack.c.l.b16 %v1274
    %v1289 = vunpack.c.l.b16 %v1275
    %v1290 = vunpack.c.l.b16 %v1276
    %v1291 = vpack.c.b16 %v1288, %v1287
    %v1292 = vpack.c.b16 %v1290, %v1289
    %v1296 = vsel %vm108, %v1282, 0
    %1298 = vmatpush.bf16.msra.mxu0 0
    %1299 = vmatpush.bf16.msra.mxu0 0
    %1300 = vmatpush.bf16.msra.mxu0 0
    %1301 = vmatpush.bf16.msra.mxu0 0
    %1302 = vmatpush.bf16.msra.mxu0 0
    %1303 = vmatpush.bf16.msra.mxu0 0
    %1304 = vmatpush.bf16.msra.mxu0 %v1292
    %1305 = vmatpush.bf16.msra.mxu0 %v1291
    %1306 = vmatmul.bf16.gmra.mxu0 %v1296
    %v1307 = vpop.f32.mrf.mxu0
    %v1308 = vadd.f32 0.0, %v1307
    %v1309 = vpop.f32.mrf.mxu0
    %1310 = vdwg.mxu0
    %v1311 = vadd.f32 %v1208, %v1308
    %v1312 = vpack.c.bf16 %v1272, %v1272
    %v1314 = vrot.slane %v1312, 1
    %1315 = vrot.lane.b32.xlu0 %v1314, 32
    %v1316 = vpop.permute.xlu0 %1315
    %v1318 = vsel %vm108, %v1316, 0
    %1320 = vmatpush.bf16.msra.mxu0 0
    %1321 = vmatpush.bf16.msra.mxu0 0
    %1322 = vmatpush.bf16.msra.mxu0 0
    %1323 = vmatpush.bf16.msra.mxu0 0
    %1324 = vmatpush.bf16.msra.mxu0 0
    %1325 = vmatpush.bf16.msra.mxu0 0
    %1326 = vmatpush.bf16.msra.mxu0 %v708
    %1327 = vmatpush.bf16.msra.mxu0 %v707
    %1328 = vmatmul.bf16.gmra.mxu0 %v1318
    %v1329 = vpop.f32.mrf.mxu0
    %v1330 = vadd.f32 0.0, %v1329
    %v1331 = vpop.f32.mrf.mxu0
    %1332 = vdwg.mxu0
    %v1334 = vrot.slane %v1330, 4
    %v1336 = vadd.f32 %v697, %v1334
    %v1337 = vxor.u32 %v1336, 2147483648
    %v1338 = vmul.f32 %v1337, 1.442695
    %v1339 = vpow.pop %v1338
    %v1340 = vadd.f32 %v1339, 1.0
    %v1341 = vrcp.pop %v1340
    %v1342 = vmul.f32 %v1340, %v1341
    %v1343 = vsub.f32 1.0, %v1342
    %v1344 = vmul.f32 %v1341, %v1343
    %v1345 = vadd.f32 %v1341, %v1344
    %vm1346 = vweird.f32 %v1340
    %vm1347 = vweird.f32 %v1341
    %vm1348 = vmor %vm1346, %vm1347
    %v1349 = vsel %vm1348, %v1341, %v1345
    %v1350 = vand.u32 2147483647, %v1340
    %vm1351 = vcmp.eq.f32.partialorder %v1350, 8.507059e+37
    %v1352 = vand.u32 %v1340, 2147483648
    %v1353 = vor.u32 1.1754944e-38, %v1352
    %v1354 = vsel %vm1351, %v1353, %v1349
    %v1355 = vmul.f32 1.0, %v1354
    %v1356 = vtanh.pop %v1336
    %v1358 = vrot.slane %v1266, 6
    %v1360 = vmul.f32 %v1355, %v1358
    %1362 = vrot.lane.b32.xlu0 %v1356, 64
    %v1363 = vpop.permute.xlu0 %1362
    %v1365 = vmul.f32 %v1355, %v1363
    %1367 = vrot.lane.b32.xlu0 %v1365, 32
    %v1368 = vpop.permute.xlu0 %1367
    %v1370 = vadd.f32 %v1360, %v1368
    %v1371 = vtanh.pop %v1370
    %1373 = vrot.lane.b32.xlu0 %v1371, 64
    %v1374 = vpop.permute.xlu0 %1373
    %v1376 = vmul.f32 %v1355, %v1374
    %v1377 = vld [vmem:[#allocation6 + $0x98] sm:$0xf]
    %v1378 = vld [vmem:[#allocation6 + $0x9c] sm:$0xf]
    %v1379 = vld [vmem:[#allocation6 + $0xa0] sm:$0xf]
    %v1380 = vld [vmem:[#allocation6 + $0xa4] sm:$0xf]
    %v1381 = vtanh.pop %v1376
    %v1382 = vpack.c.bf16 %v1381, %v1381
    %v1384 = vrot.slane %v1382, 2
    %1385 = vrot.lane.b32.xlu0 %v1384, 32
    %v1386 = vpop.permute.xlu0 %1385
    %v1391 = vunpack.c.l.b16 %v1377
    %v1392 = vunpack.c.l.b16 %v1378
    %v1393 = vunpack.c.l.b16 %v1379
    %v1394 = vunpack.c.l.b16 %v1380
    %v1395 = vpack.c.b16 %v1392, %v1391
    %v1396 = vpack.c.b16 %v1394, %v1393
    %v1400 = vsel %vm108, %v1386, 0
    %1402 = vmatpush.bf16.msra.mxu0 0
    %1403 = vmatpush.bf16.msra.mxu0 0
    %1404 = vmatpush.bf16.msra.mxu0 0
    %1405 = vmatpush.bf16.msra.mxu0 0
    %1406 = vmatpush.bf16.msra.mxu0 0
    %1407 = vmatpush.bf16.msra.mxu0 0
    %1408 = vmatpush.bf16.msra.mxu0 %v1396
    %1409 = vmatpush.bf16.msra.mxu0 %v1395
    %1410 = vmatmul.bf16.gmra.mxu0 %v1400
    %v1411 = vpop.f32.mrf.mxu0
    %v1412 = vadd.f32 0.0, %v1411
    %v1413 = vpop.f32.mrf.mxu0
    %1414 = vdwg.mxu0
    %v1415 = vadd.f32 %v1311, %v1412
    %v1416 = vpack.c.bf16 %v1376, %v1376
    %v1418 = vrot.slane %v1416, 2
    %1419 = vrot.lane.b32.xlu0 %v1418, 32
    %v1420 = vpop.permute.xlu0 %1419
    %v1422 = vsel %vm108, %v1420, 0
    %1424 = vmatpush.bf16.msra.mxu0 0
    %1425 = vmatpush.bf16.msra.mxu0 0
    %1426 = vmatpush.bf16.msra.mxu0 0
    %1427 = vmatpush.bf16.msra.mxu0 0
    %1428 = vmatpush.bf16.msra.mxu0 0
    %1429 = vmatpush.bf16.msra.mxu0 0
    %1430 = vmatpush.bf16.msra.mxu0 %v708
    %1431 = vmatpush.bf16.msra.mxu0 %v707
    %1432 = vmatmul.bf16.gmra.mxu0 %v1422
    %v1433 = vpop.f32.mrf.mxu0
    %v1434 = vadd.f32 0.0, %v1433
    %v1435 = vpop.f32.mrf.mxu0
    %1436 = vdwg.mxu0
    %v1438 = vrot.slane %v1434, 2
    %v1440 = vadd.f32 %v697, %v1438
    %v1441 = vxor.u32 %v1440, 2147483648
    %v1442 = vmul.f32 %v1441, 1.442695
    %v1443 = vpow.pop %v1442
    %v1444 = vadd.f32 %v1443, 1.0
    %v1445 = vrcp.pop %v1444
    %v1446 = vmul.f32 %v1444, %v1445
    %v1447 = vsub.f32 1.0, %v1446
    %v1448 = vmul.f32 %v1445, %v1447
    %v1449 = vadd.f32 %v1445, %v1448
    %vm1450 = vweird.f32 %v1444
    %vm1451 = vweird.f32 %v1445
    %vm1452 = vmor %vm1450, %vm1451
    %v1453 = vsel %vm1452, %v1445, %v1449
    %v1454 = vand.u32 2147483647, %v1444
    %vm1455 = vcmp.eq.f32.partialorder %v1454, 8.507059e+37
    %v1456 = vand.u32 %v1444, 2147483648
    %v1457 = vor.u32 1.1754944e-38, %v1456
    %v1458 = vsel %vm1455, %v1457, %v1453
    %v1459 = vmul.f32 1.0, %v1458
    %v1460 = vtanh.pop %v1440
    %v1462 = vrot.slane %v1370, 6
    %v1464 = vmul.f32 %v1459, %v1462
    %1466 = vrot.lane.b32.xlu0 %v1460, 64
    %v1467 = vpop.permute.xlu0 %1466
    %v1469 = vmul.f32 %v1459, %v1467
    %1471 = vrot.lane.b32.xlu0 %v1469, 32
    %v1472 = vpop.permute.xlu0 %1471
    %v1474 = vadd.f32 %v1464, %v1472
    %v1475 = vtanh.pop %v1474
    %1477 = vrot.lane.b32.xlu0 %v1475, 64
    %v1478 = vpop.permute.xlu0 %1477
    %v1480 = vmul.f32 %v1459, %v1478
    %v1481 = vld [vmem:[#allocation6 + $0xa8] sm:$0xf]
    %v1482 = vld [vmem:[#allocation6 + $0xac] sm:$0xf]
    %v1483 = vld [vmem:[#allocation6 + $0xb0] sm:$0xf]
    %v1484 = vld [vmem:[#allocation6 + $0xb4] sm:$0xf]
    %v1485 = vtanh.pop %v1480
    %v1486 = vpack.c.bf16 %v1485, %v1485
    %v1488 = vrot.slane %v1486, 3
    %1489 = vrot.lane.b32.xlu0 %v1488, 32
    %v1490 = vpop.permute.xlu0 %1489
    %v1495 = vunpack.c.l.b16 %v1481
    %v1496 = vunpack.c.l.b16 %v1482
    %v1497 = vunpack.c.l.b16 %v1483
    %v1498 = vunpack.c.l.b16 %v1484
    %v1499 = vpack.c.b16 %v1496, %v1495
    %v1500 = vpack.c.b16 %v1498, %v1497
    %v1504 = vsel %vm108, %v1490, 0
    %1506 = vmatpush.bf16.msra.mxu0 0
    %1507 = vmatpush.bf16.msra.mxu0 0
    %1508 = vmatpush.bf16.msra.mxu0 0
    %1509 = vmatpush.bf16.msra.mxu0 0
    %1510 = vmatpush.bf16.msra.mxu0 0
    %1511 = vmatpush.bf16.msra.mxu0 0
    %1512 = vmatpush.bf16.msra.mxu0 %v1500
    %1513 = vmatpush.bf16.msra.mxu0 %v1499
    %1514 = vmatmul.bf16.gmra.mxu0 %v1504
    %v1515 = vpop.f32.mrf.mxu0
    %v1516 = vadd.f32 0.0, %v1515
    %v1517 = vpop.f32.mrf.mxu0
    %1518 = vdwg.mxu0
    %v1519 = vadd.f32 %v1415, %v1516
    %v1520 = vld [vmem:[#allocation8 + $0x2] sm:$0x1]
    %v1521 = vld [vmem:[#allocation8 + $0x3] sm:$0x1]
    %v1522 = vperm.slane %v1520, 0
    %v1523 = vadd.f32 %v1519, %v1522
    %v1524 = vxor.u32 %v1523, 2147483648
    %v1525 = vmul.f32 %v1524, 1.442695
    %v1526 = vpow.pop %v1525
    %v1527 = vadd.f32 %v1526, 1.0
    %v1528 = vrcp.pop %v1527
    %v1529 = vmul.f32 %v1527, %v1528
    %v1530 = vsub.f32 1.0, %v1529
    %v1531 = vmul.f32 %v1528, %v1530
    %v1532 = vadd.f32 %v1528, %v1531
    %vm1533 = vweird.f32 %v1527
    %vm1534 = vweird.f32 %v1528
    %vm1535 = vmor %vm1533, %vm1534
    %v1536 = vsel %vm1535, %v1528, %v1532
    %v1537 = vand.u32 2147483647, %v1527
    %vm1538 = vcmp.eq.f32.partialorder %v1537, 8.507059e+37
    %v1539 = vand.u32 %v1527, 2147483648
    %v1540 = vor.u32 1.1754944e-38, %v1539
    %v1541 = vsel %vm1538, %v1540, %v1536
    %v1542 = vmul.f32 1.0, %v1541
    %v1543 = vld [vmem:[#allocation6 + $0xb8] sm:$0xf]
    %v1544 = vld [vmem:[#allocation6 + $0xbc] sm:$0xf]
    %v1545 = vld [vmem:[#allocation6 + $0xc0] sm:$0xf]
    %v1546 = vld [vmem:[#allocation6 + $0xc4] sm:$0xf]
    %v1547 = vld [vmem:[#allocation6 + $0xc8] sm:$0xf]
    %v1548 = vld [vmem:[#allocation6 + $0xcc] sm:$0xf]
    %v1549 = vld [vmem:[#allocation6 + $0xd0] sm:$0xf]
    %v1550 = vld [vmem:[#allocation6 + $0xd4] sm:$0xf]
    %v1551 = vld [vmem:[#allocation6 + $0xd8] sm:$0xf]
    %v1552 = vld [vmem:[#allocation6 + $0xdc] sm:$0xf]
    %v1553 = vld [vmem:[#allocation6 + $0xe0] sm:$0xf]
    %v1554 = vld [vmem:[#allocation6 + $0xe4] sm:$0xf]
    %v1555 = vld [vmem:[#allocation6 + $0xe8] sm:$0xf]
    %v1556 = vld [vmem:[#allocation6 + $0xec] sm:$0xf]
    %v1557 = vld [vmem:[#allocation6 + $0xf0] sm:$0xf]
    %v1558 = vld [vmem:[#allocation6 + $0xf4] sm:$0xf]
    %v1559 = vpack.c.bf16 %v1542, %v1542
    %v1560 = vperm.slane %v1521, 0
    %v1577 = vunpack.c.l.b16 %v1543
    %v1578 = vunpack.c.l.b16 %v1544
    %v1579 = vunpack.c.l.b16 %v1545
    %v1580 = vunpack.c.l.b16 %v1546
    %v1581 = vunpack.c.l.b16 %v1547
    %v1582 = vunpack.c.l.b16 %v1548
    %v1583 = vunpack.c.l.b16 %v1549
    %v1584 = vunpack.c.l.b16 %v1550
    %v1585 = vunpack.c.l.b16 %v1551
    %v1586 = vunpack.c.l.b16 %v1552
    %v1587 = vunpack.c.l.b16 %v1553
    %v1588 = vunpack.c.l.b16 %v1554
    %v1589 = vunpack.c.l.b16 %v1555
    %v1590 = vunpack.c.l.b16 %v1556
    %v1591 = vunpack.c.l.b16 %v1557
    %v1592 = vunpack.c.l.b16 %v1558
    %v1593 = vpack.c.b16 %v1578, %v1577
    %v1594 = vpack.c.b16 %v1580, %v1579
    %v1595 = vpack.c.b16 %v1582, %v1581
    %v1596 = vpack.c.b16 %v1584, %v1583
    %v1597 = vpack.c.b16 %v1586, %v1585
    %v1598 = vpack.c.b16 %v1588, %v1587
    %v1599 = vpack.c.b16 %v1590, %v1589
    %v1600 = vpack.c.b16 %v1592, %v1591
    %1609 = vmatpush.bf16.msra.mxu0 %v1600
    %1610 = vmatpush.bf16.msra.mxu0 %v1599
    %1611 = vmatpush.bf16.msra.mxu0 %v1598
    %1612 = vmatpush.bf16.msra.mxu0 %v1597
    %1613 = vmatpush.bf16.msra.mxu0 %v1596
    %1614 = vmatpush.bf16.msra.mxu0 %v1595
    %1615 = vmatpush.bf16.msra.mxu0 %v1594
    %1616 = vmatpush.bf16.msra.mxu0 %v1593
    %1617 = vmatmul.bf16.gmra.mxu0 %v1559
    %v1618 = vpop.f32.mrf.mxu0
    %v1619 = vadd.f32 %v1560, %v1618
    %v1620 = vpop.f32.mrf.mxu0
    %1621 = vdwg.mxu0
    %vm1622 = vcmask 115712
    %1623 = vst.msk [vmem:[#allocation9] sm:$0x3] %vm1622, %v1619
    // Predicated region
    $region26: #{tpu_custom_call.1} parent=1 // pred_check
      _
    $region27: #{tpu_custom_call.1} parent=1 // pred_check_branch
      %1625 = sbr.rel (0) target = $region29
    $region28: #{tpu_custom_call.1} parent=1 // pred_region
      %1627 = vsyncadd [#allocation5], 0
      %s1629 = sshll.u32 [#allocation9], 4
      %s1630 = int_to_ptr.vmem [resolvable:$true] %s1629
      %s1631 = sshll.u32 %s3, 4
      %s1632 = int_to_ptr.hbm [resolvable:$true] %s1631
      %1634 = dma.vmem_to_hbm [thread:$0]  %s1630, 32, %s1632, [#allocation5]
    $region29: #{tpu_custom_call.1} parent=1 // pred_fallthru
      _
    // Predicated region
    $region30: #{tpu_custom_call.1} parent=1 // pred_check
      _
    $region31: #{tpu_custom_call.1} parent=1 // pred_check_branch
      %1636 = sbr.rel (0) target = $region33
    $region32: #{tpu_custom_call.1} parent=1 // pred_region
      %1638 = dma.done [#allocation5], 32
    $region33: #{tpu_custom_call.1} parent=1 // pred_fallthru
      _
    %1639 = vsyncpa [#allocation4], 1
    %1640 = vsyncpa [#allocation7], 1
    %1641 = vsyncpa [#allocation5], 1

</llo_original>
